<compile_context>
chip_gen: v5e
topology: v5e:2x2
jax: 0.10.0
libtpu: 0.0.40
codegen_flags: <defaults>
</compile_context>

<pallas_src>
import functools

import jax
import jax.numpy as jnp
from jax.experimental import pallas as pl
from jax.experimental.pallas import tpu as pltpu

ACTIVATION_SIGMOID = 0
ACTIVATION_SOFTMAX = 1

_VMEM_LIMIT = 48 * 1024 * 1024  # safe on v5e/v6e (128 MiB) and v7x (64 MiB)


def _round_up(v, m):
    return (v + m - 1) // m * m


# ----------------------------------------------------------------------------
# Pallas kernels
# ----------------------------------------------------------------------------
def _mm_kernel(*refs, relu, has_residual):
    """Weight-stationary matmul: o = act(A @ B * scale + bias [+ residual])."""
    if has_residual:
        a_ref, b_ref, s_ref, c_ref, r_ref, o_ref = refs
    else:
        a_ref, b_ref, s_ref, c_ref, o_ref = refs
        r_ref = None

    acc = jnp.dot(a_ref[...], b_ref[...], preferred_element_type=jnp.float32)
    acc = acc * s_ref[...] + c_ref[...]
    if has_residual:
        acc = acc + r_ref[...].astype(jnp.float32)
    if relu:
        acc = jnp.maximum(acc, 0.0)
    o_ref[...] = acc.astype(o_ref.dtype)


def _pick_tiles(M, Nc, K):
    """M is pre-padded to a multiple of 256; Nc is always a multiple of 128."""
    tm = 512 if M % 512 == 0 else 256
    # Keep the double-buffered A block modest (v7x has only 64 MiB VMEM).
    if tm * K * 2 > 4 * 1024 * 1024:
        tm = 256
    tn = 256 if Nc % 256 == 0 else 128
    # Megacore: keep >= 2 parallel grid points when the shapes allow it so the
    # second TensorCore (v7x) is never idle.
    if (M // tm) * (Nc // tn) < 2:
        if Nc >= 256:
            tn = 128
        elif M >= 512:
            tm = 256
    return tm, tn


def matmul_bn_act(a, b, scale, bias, relu, residual=None):
    """a: (M, K) bf16 patches, b: (K, Cout) bf16 weights,
    scale/bias: (Cout,) f32 folded BN, residual: optional (M, Cout) bf16."""
    M, K = a.shape
    _, Nc = b.shape

    # Pad pixel rows up to a multiple of 256 (zero rows, sliced off after) so
    # tm is always MXU-friendly and the grid stays tiny.
    Mp = _round_up(M, 256)
    if Mp != M:
        a = jnp.pad(a, ((0, Mp - M), (0, 0)))
        if residual is not None:
            residual = jnp.pad(residual, ((0, Mp - M), (0, 0)))

    tm, tn = _pick_tiles(Mp, Nc, K)

    scale2 = scale.reshape(1, Nc).astype(jnp.float32)
    bias2 = bias.reshape(1, Nc).astype(jnp.float32)

    in_specs = [
        pl.BlockSpec((tm, K), lambda i, j: (i, 0)),   # A: full K per step
        pl.BlockSpec((K, tn), lambda i, j: (0, j)),   # B: weight-stationary
        pl.BlockSpec((1, tn), lambda i, j: (0, j)),
        pl.BlockSpec((1, tn), lambda i, j: (0, j)),
    ]
    args = [a, b, scale2, bias2]
    if residual is not None:
        in_specs.append(pl.BlockSpec((tm, tn), lambda i, j: (i, j)))
        args.append(residual)

    out = pl.pallas_call(
        functools.partial(_mm_kernel, relu=relu,
                          has_residual=residual is not None),
        out_shape=jax.ShapeDtypeStruct((Mp, Nc), jnp.bfloat16),
        grid_spec=pltpu.PrefetchScalarGridSpec(
            num_scalar_prefetch=0,
            grid=(Mp // tm, Nc // tn),
            in_specs=in_specs,
            out_specs=pl.BlockSpec((tm, tn), lambda i, j: (i, j)),
        ),
        compiler_params=pltpu.CompilerParams(
            dimension_semantics=("parallel", "parallel"),
            vmem_limit_bytes=_VMEM_LIMIT),
    )(*args)

    if Mp != M:
        out = out[:M]
    return out


def _maxpool_kernel(x_ref, o_ref):
    o_ref[...] = jnp.max(x_ref[...], axis=0)


def _head_kernel(x_ref, w_ref, b_ref, o_ref, *, activation):
    """Global average pool + Linear + activation, fully fused (f32 compute)."""
    hw = x_ref.shape[1]
    pooled = jnp.sum(x_ref[...].astype(jnp.float32), axis=1) * (1.0 / hw)
    logits = jnp.dot(pooled, w_ref[...],
                     preferred_element_type=jnp.float32) + b_ref[...]
    if activation == ACTIVATION_SIGMOID:
        out = 1.0 / (1.0 + jnp.exp(-logits))
    elif activation == ACTIVATION_SOFTMAX:
        m = jnp.max(logits, axis=-1, keepdims=True)
        e = jnp.exp(logits - m)
        out = e / jnp.sum(e, axis=-1, keepdims=True)
    else:
        out = logits
    o_ref[...] = out.astype(o_ref.dtype)


def head(feat, w, b, activation):
    """feat: (N, HW, C) bf16; w: (C, classCount) f32; b: (1, classCount) f32."""
    N, HW, C = feat.shape
    Cout = w.shape[1]
    return pl.pallas_call(
        functools.partial(_head_kernel, activation=activation),
        out_shape=jax.ShapeDtypeStruct((N, Cout), jnp.float32),
        grid=(1,),
        in_specs=[pl.BlockSpec((N, HW, C), lambda i: (0, 0, 0)),
                  pl.BlockSpec((C, Cout), lambda i: (0, 0)),
                  pl.BlockSpec((1, Cout), lambda i: (0, 0))],
        out_specs=pl.BlockSpec((N, Cout), lambda i: (0, 0)),
        compiler_params=pltpu.CompilerParams(vmem_limit_bytes=_VMEM_LIMIT),
    )(feat, w, b)


# ----------------------------------------------------------------------------
# Plain-JAX glue: patch extraction, layer composition
# ----------------------------------------------------------------------------
def im2col(x, k, stride, pad):
    """x: (N, H, W, C) bf16 -> (N*Ho*Wo, k*k*C) patches (row-major (kh, kw, C))."""
    N, H, W, C = x.shape
    Ho = (H + 2 * pad - k) // stride + 1
    Wo = (W + 2 * pad - k) // stride + 1
    if k == 1:
        # Fast path: no patch duplication / stack for 1x1 convs.
        if stride == 1:
            return x.reshape(N * H * W, C), Ho, Wo
        xs = x[:, ::stride, ::stride, :]
        return xs.reshape(N * Ho * Wo, C), Ho, Wo
    # TODO(synk): 3x3/7x7 still materialize k*k-duplicated patches in HBM; a
    # shifted-window direct conv (tap grid axis / manual DMA) would remove it.
    xp = jnp.pad(x, ((0, 0), (pad, pad), (pad, pad), (0, 0)))
    taps = []
    for dy in range(k):
        for dx in range(k):
            taps.append(xp[:, dy:dy + stride * Ho:stride,
                           dx:dx + stride * Wo:stride, :])
    patches = jnp.stack(taps, axis=3)                # (N, Ho, Wo, k*k, C)
    return patches.reshape(N * Ho * Wo, k * k * C), Ho, Wo


def conv_bn(x, p, stride, relu, residual=None):
    """Conv(k x k, stride, torchvision padding) + folded BN + optional residual + act."""
    N = x.shape[0]
    k = p["k"]
    pad = {7: 3, 3: 1, 1: 0}[k]
    cols, Ho, Wo = im2col(x, k, stride, pad)
    Kw = p["w"].shape[0]
    if cols.shape[1] != Kw:                          # stem: K padded 147 -> 256
        cols = jnp.pad(cols, ((0, 0), (0, Kw - cols.shape[1])))
    out = matmul_bn_act(cols, p["w"], p["scale"], p["bias"], relu,
                        residual=residual)
    return out.reshape(N, Ho, Wo, p["w"].shape[1])


def maxpool_3x3_s2(x):
    """3x3 maxpool, stride 2, pad 1 (torchvision resnet stem)."""
    N, H, W, C = x.shape
    Ho = (H + 2 - 3) // 2 + 1
    Wo = (W + 2 - 3) // 2 + 1
    xp = jnp.pad(x, ((0, 0), (1, 1), (1, 1), (0, 0)),
                 constant_values=-jnp.inf)
    taps = []
    for dy in range(3):
        for dx in range(3):
            taps.append(xp[:, dy:dy + 2 * Ho:2, dx:dx + 2 * Wo:2, :])
    # TODO(synk): the 9-tap stack is still materialized in HBM; moving the tap
    # shifts into the kernel would avoid the 9x duplication at the largest res.
    M = N * Ho * Wo
    patches = jnp.stack(taps, axis=0).reshape(9, M, C)
    Mp = _round_up(M, 256)
    if Mp != M:
        patches = jnp.pad(patches, ((0, 0), (0, Mp - M), (0, 0)))
    tm = 256
    out = pl.pallas_call(
        _maxpool_kernel,
        out_shape=jax.ShapeDtypeStruct((Mp, C), jnp.bfloat16),
        grid=(Mp // tm,),
        in_specs=[pl.BlockSpec((9, tm, C), lambda i: (0, i, 0))],
        out_specs=pl.BlockSpec((tm, C), lambda i: (i, 0)),
        compiler_params=pltpu.CompilerParams(
            dimension_semantics=("parallel",),
            vmem_limit_bytes=_VMEM_LIMIT),
    )(patches)
    return out[:M].reshape(N, Ho, Wo, C)


def bottleneck(x, blk):
    if blk["down"] is not None:
        identity = conv_bn(x, blk["down"], stride=blk["stride"], relu=False)
    else:
        identity = x
    out = conv_bn(x, blk["conv1"], stride=1, relu=True)
    out = conv_bn(out, blk["conv2"], stride=blk["stride"], relu=True)
    N, H, W, Cid = identity.shape
    # Residual add + ReLU fused into the conv3 matmul epilogue.
    out = conv_bn(out, blk["conv3"], stride=1, relu=True,
                  residual=identity.reshape(N * H * W, Cid))
    return out


def resnet101_forward(x_nchw, params, activation=ACTIVATION_SIGMOID):
    # NCHW -> NHWC, bf16 activations throughout the conv trunk.
    x = jnp.transpose(x_nchw, (0, 2, 3, 1)).astype(jnp.bfloat16)
    x = conv_bn(x, params["conv1"], stride=2, relu=True)
    x = maxpool_3x3_s2(x)
    for blocks in params["layers"]:
        for blk in blocks:
            x = bottleneck(x, blk)
    N, H, W, C = x.shape
    feat = x.reshape(N, H * W, C)
    return head(feat, params["fc_w"], params["fc_b"], activation)


# ----------------------------------------------------------------------------
# Deterministic parameter construction (synthetic weights, BN folded)
# ----------------------------------------------------------------------------
class ParamGen:
    def __init__(self, seed=0):
        self.key = jax.random.PRNGKey(seed)

    def next(self):
        self.key, sub = jax.random.split(self.key)
        return sub


def make_conv_bn(gen, cin, cout, k, cin_phys=None, cout_phys=None, k_rows=None):
    """Folded conv+BN params, stored lane/sublane padded.

    cin_phys : physical input channels of the incoming activation (extra
               weight rows are zero; the padded activation channels are zero
               anyway so the result is exact).
    cout_phys: physical output channels (zero weight columns, zero scale/bias
               => padded channels stay exactly 0 through BN + ReLU).
    k_rows   : pad the flattened K dim to this many rows (stem: 147 -> 256).
    """
    cin_phys = cin if cin_phys is None else cin_phys
    cout_phys = cout if cout_phys is None else cout_phys
    fan_in = cin * k * k
    w = jax.random.normal(gen.next(), (cout, cin, k, k), jnp.float32)
    w = w * (2.0 / fan_in) ** 0.5                      # He init (PyTorch conv style)
    gamma = 1.0 + 0.1 * jax.random.normal(gen.next(), (cout,), jnp.float32)
    beta = 0.05 * jax.random.normal(gen.next(), (cout,), jnp.float32)
    mean = 0.05 * jax.random.normal(gen.next(), (cout,), jnp.float32)
    var = 1.0 + 0.1 * jnp.abs(jax.random.normal(gen.next(), (cout,), jnp.float32))
    eps = 1e-5
    scale = gamma / jnp.sqrt(var + eps)                # BN folded into affine
    bias = beta - mean * scale
    # (Cout, Cin, kh, kw) -> (kh, kw, Cin, Cout), pad channels, flatten K.
    w4 = jnp.transpose(w, (2, 3, 1, 0))
    w4 = jnp.pad(w4, ((0, 0), (0, 0),
                      (0, cin_phys - cin), (0, cout_phys - cout)))
    w2 = w4.reshape(k * k * cin_phys, cout_phys)
    if k_rows is not None and k_rows > w2.shape[0]:
        w2 = jnp.pad(w2, ((0, k_rows - w2.shape[0]), (0, 0)))
    scale = jnp.pad(scale, (0, cout_phys - cout))
    bias = jnp.pad(bias, (0, cout_phys - cout))
    return {"w": w2.astype(jnp.bfloat16), "scale": scale, "bias": bias, "k": k}


def make_resnet101_params(seed, class_count):
    gen = ParamGen(seed)

    def phys(c):                      # lane-pad channel counts below 128 to 128
        return max(c, 128)

    params = {"conv1": make_conv_bn(gen, 3, 64, 7,
                                    cout_phys=phys(64), k_rows=256)}
    inplanes, in_phys = 64, phys(64)
    layers = []
    for planes, nblocks, stride in [(64, 3, 1), (128, 4, 2), (256, 23, 2), (512, 3, 2)]:
        blocks = []
        for b in range(nblocks):
            s = stride if b == 0 else 1
            needs_down = (s != 1) or (inplanes != planes * 4)
            blocks.append({
                "conv1": make_conv_bn(gen, inplanes, planes, 1,
                                      cin_phys=in_phys, cout_phys=phys(planes)),
                "conv2": make_conv_bn(gen, planes, planes, 3,
                                      cin_phys=phys(planes), cout_phys=phys(planes)),
                "conv3": make_conv_bn(gen, planes, planes * 4, 1,
                                      cin_phys=phys(planes), cout_phys=phys(planes * 4)),
                "down": (make_conv_bn(gen, inplanes, planes * 4, 1,
                                      cin_phys=in_phys, cout_phys=phys(planes * 4))
                         if needs_down else None),
                "stride": s,
            })
            inplanes, in_phys = planes * 4, phys(planes * 4)
        layers.append(blocks)
    params["layers"] = layers
    # fc: nn.Linear(512*4, classCount) (PyTorch default uniform init); f32 head.
    bound = (1.0 / 2048.0) ** 0.5
    params["fc_w"] = jax.random.uniform(gen.next(), (2048, class_count),
                                        jnp.float32, -bound, bound)
    params["fc_b"] = jax.random.uniform(gen.next(), (1, class_count),
                                        jnp.float32, -bound, bound)
    return params


# ----------------------------------------------------------------------------
if __name__ == "__main__":
    CLASS_COUNT = 14
    # Small input consistent with the module (nominal 224x224x3 NCHW); 64x64
    # keeps the 5 stride-2 stages well-formed while staying cheap.
    x = jax.random.normal(jax.random.PRNGKey(0), (2, 3, 64, 64), jnp.float32)

    params = make_resnet101_params(seed=0, class_count=CLASS_COUNT)
    out = resnet101_forward(x, params, activation=ACTIVATION_SIGMOID)
    out = jax.block_until_ready(out)

    assert out.shape == (2, CLASS_COUNT), out.shape
    assert bool(jnp.all(jnp.isfinite(out)))
    assert bool(jnp.all((out >= 0.0) & (out <= 1.0)))   # sigmoid range
    print("KERNEL_OK")
</pallas_src>

<mosaic_0001>
module attributes {stable_mosaic.version = 11 : i64} {
  func.func @_mm_kernel(%arg0: i32, %arg1: i32, %arg2: memref<512x256xbf16, #tpu.memory_space<vmem>>, %arg3: memref<256x128xbf16, #tpu.memory_space<vmem>>, %arg4: memref<1x128xf32, #tpu.memory_space<vmem>>, %arg5: memref<1x128xf32, #tpu.memory_space<vmem>>, %arg6: memref<512x128xbf16, #tpu.memory_space<vmem>>) attributes {dimension_semantics = [#tpu.dimension_semantics<parallel>, #tpu.dimension_semantics<parallel>], iteration_bounds = array<i64: 4, 1>, scalar_prefetch = 0 : i64, scratch_operands = 0 : i64, tpu.core_type = #tpu.core_type<tc>, window_params = [{transform_indices = @transform_0, window_bounds = array<i64: 512, 256>}, {transform_indices = @transform_1, window_bounds = array<i64: 256, 128>}, {transform_indices = @transform_2, window_bounds = array<i64: 1, 128>}, {transform_indices = @transform_3, window_bounds = array<i64: 1, 128>}, {transform_indices = @transform_4, window_bounds = array<i64: 512, 128>}]} {
    %c0 = arith.constant 0 : index
    %c0_0 = arith.constant 0 : index
    %0 = vector.load %arg2[%c0, %c0_0] : memref<512x256xbf16, #tpu.memory_space<vmem>>, vector<512x256xbf16>
    %c0_1 = arith.constant 0 : index
    %c0_2 = arith.constant 0 : index
    %1 = vector.load %arg3[%c0_1, %c0_2] : memref<256x128xbf16, #tpu.memory_space<vmem>>, vector<256x128xbf16>
    %cst = arith.constant dense<0.000000e+00> : vector<512x128xf32>
    %2 = tpu.matmul %0, %1, %cst {dimension_numbers = #tpu.dot_dimension_numbers<[1], [0], [0], [1], [0, 0, 1, 1], [], []>} : vector<512x256xbf16>, vector<256x128xbf16>, vector<512x128xf32> -> vector<512x128xf32>
    %c0_3 = arith.constant 0 : index
    %c0_4 = arith.constant 0 : index
    %3 = vector.load %arg4[%c0_3, %c0_4] : memref<1x128xf32, #tpu.memory_space<vmem>>, vector<1x128xf32>
    %4 = vector.broadcast %3 : vector<1x128xf32> to vector<512x128xf32>
    %5 = arith.mulf %2, %4 : vector<512x128xf32>
    %c0_5 = arith.constant 0 : index
    %c0_6 = arith.constant 0 : index
    %6 = vector.load %arg5[%c0_5, %c0_6] : memref<1x128xf32, #tpu.memory_space<vmem>>, vector<1x128xf32>
    %7 = vector.broadcast %6 : vector<1x128xf32> to vector<512x128xf32>
    %8 = arith.addf %5, %7 : vector<512x128xf32>
    %cst_7 = arith.constant 0.000000e+00 : f32
    %9 = vector.broadcast %cst_7 : f32 to vector<512x128xf32>
    %10 = arith.maximumf %8, %9 : vector<512x128xf32>
    %11 = arith.truncf %10 : vector<512x128xf32> to vector<512x128xbf16>
    %c0_8 = arith.constant 0 : index
    %c0_9 = arith.constant 0 : index
    %12 = vector.load %arg6[%c0_8, %c0_9] : memref<512x128xbf16, #tpu.memory_space<vmem>>, vector<512x128xbf16>
    tpu.vector_store %arg6[%c0_8, %c0_9], %11 {strides = array<i32>} : memref<512x128xbf16, #tpu.memory_space<vmem>>, vector<512x128xbf16>,
    return
  }
  func.func @transform_0(%arg0: i32, %arg1: i32) -> (i32, i32) {
    %c0_i32 = arith.constant 0 : i32
    %c0_i32_0 = arith.constant 0 : i32
    return %arg0, %c0_i32 : i32, i32
  }
  func.func @transform_1(%arg0: i32, %arg1: i32) -> (i32, i32) {
    %c0_i32 = arith.constant 0 : i32
    %c0_i32_0 = arith.constant 0 : i32
    return %c0_i32, %arg1 : i32, i32
  }
  func.func @transform_2(%arg0: i32, %arg1: i32) -> (i32, i32) {
    %c0_i32 = arith.constant 0 : i32
    %c0_i32_0 = arith.constant 0 : i32
    return %c0_i32, %arg1 : i32, i32
  }
  func.func @transform_3(%arg0: i32, %arg1: i32) -> (i32, i32) {
    %c0_i32 = arith.constant 0 : i32
    %c0_i32_0 = arith.constant 0 : i32
    return %c0_i32, %arg1 : i32, i32
  }
  func.func @transform_4(%arg0: i32, %arg1: i32) -> (i32, i32) {
    %c0_i32 = arith.constant 0 : i32
    return %arg0, %arg1 : i32, i32
  }
}

</mosaic_0001>

<llo_original>
// kernel: tpu_custom_call.1
$region0: #{tpu_custom_call.1}
  #allocation0 [shape = 'u32[]', space=smem, size = 0x4, offset = 0x4, fixed_abs, tag = 'smem constant byte address 0x4 - core index']
  #allocation1 [shape = 'u32[72,128]{1,0:T(1,128)}', space=vmem, size = 0x9000, scoped, tag = 'internal scratch']
  %s0 = inlined_call_operand.hbm [shape: bf16[2048,256], index: 0, kind: input, shape index: {}]
  %s1 = inlined_call_operand.hbm [shape: bf16[256,128], index: 1, kind: input, shape index: {}]
  %s2 = inlined_call_operand.vmem [shape: f32[1,128], index: 2, kind: input, shape index: {}]
  %s3 = inlined_call_operand.vmem [shape: f32[1,128], index: 3, kind: input, shape index: {}]
  %s4 = inlined_call_operand.hbm [shape: bf16[2048,128], index: 4, kind: output, shape index: {}]
  %s5 = sld [smem:[#allocation0]]
  $region57: #{tpu_custom_call.1} parent=0
    _
  %s7 = ssub.s32 1, %s5
  %s8 = scalar_select 0, %s7, %s5
  $region1: #{tpu_custom_call.1} parent=0
    #allocation2 [shape = 'u8[524288]{0}', space=vmem, size = 0x80000, scoped, tag = 'input window, operand 0']
    #allocation3 [shape = 's32[2]{0}', space=sflag, size = 0x8, scoped, tag = 'scoped memory for tpu_custom_call.1']
    #allocation4 [shape = 's32[2]{0}', space=sflag, size = 0x8, scoped, tag = 'scoped memory for tpu_custom_call.1']
    #allocation5 [shape = 'u8[65536]{0}', space=vmem, size = 0x10000, scoped, tag = 'input window, operand 1, single buffered']
    #allocation6 [shape = 's32[1]{0}', space=sflag, size = 0x4, scoped, tag = 'scoped memory for tpu_custom_call.1']
    #allocation7 [shape = 'u8[262144]{0}', space=vmem, size = 0x40000, scoped, tag = 'output window, operand 0']
    %9 = vsyncpa [#allocation3], 0
    %s10 = scalar_lea.sflag [#allocation3], 1
    %11 = vsyncpa %s10, 0
    %12 = vsyncpa [#allocation6], 0
    %13 = vsyncpa [#allocation4], 0
    %s14 = scalar_lea.sflag [#allocation4], 1
    %15 = vsyncpa %s14, 0
    loop: start=0, step=1, limit=6
    $region2: #{tpu_custom_call.1} parent=1 // loop_pre_header
      _
    $region3: #{tpu_custom_call.1} parent=1 // loop_header
      %s17 = sphi 0, %s21
      %p18 = scmp.ge.s32.totalorder %s17, 6
      %s24 = sphi 0, %s36
      %s25 = sphi 0, %s32
      %s26 = sphi 0, %s24
      %s27 = sphi 0, %s25
      %s28 = sphi 0, %s26
      %s29 = sphi 0, %s27
      %s39 = sphi 0, %s41
      %s42 = sphi 0, %s39
      %s43 = sphi 0, %s42
      %s59 = sphi 0, %s43
      %s65 = sphi 0, %s67
      %s68 = sphi 0, %s65
      %s69 = sphi 0, %s68
      %s85 = sphi 0, %s69
      %s91 = sphi 0, %s93
      %s94 = sphi 0, %s91
      %s95 = sphi 0, %s94
      %s111 = sphi 0, %s95
      %s117 = sphi 0, %s119
      %s120 = sphi 0, %s117
      %s121 = sphi 0, %s120
      %s137 = sphi 0, %s121
      %s145 = sphi 0, %s147
      %s148 = sphi 0, %s145
      %s149 = sphi 0, %s148
      %s165 = sphi 0, %s149
    $region4: #{tpu_custom_call.1} parent=1 // loop_header_branch
      %20 = sbr.rel (%p18) target = $region8
    $region5: #{tpu_custom_call.1} parent=1 // loop_body
      %s22 = ssub.s32 %s17, 1
      %s23 = ssub.s32 %s17, 2
      %s30 = sadd.s32 1, %s25
      %p31 = scmp.ge.s32.totalorder %s30, 1
      %s32 = scalar_select %p31, 0, %s30
      %s33 = sadd.s32 1, %s24
      %s34 = scalar_select %p31, %s33, %s24
      %p35 = scmp.ge.s32.totalorder %s34, 4
      %s36 = scalar_select %p35, 0, %s34
      %s37 = ssub.s32 %s24, %s36
      %p38 = scmp.eq.s32.totalorder %s37, 0
      %s40 = sadd.s32 %s39, 1
      %s41 = scalar_select %p38, %s39, %s40
      %p44 = pneg %p38
      %p45 = scmp.eq.s32.totalorder %s17, 3
      %p46 = por %p44, %p45
      %p47 = scmp.ne.s32.totalorder %s39, %s42
      %p48 = scmp.eq.s32.totalorder %s17, 0
      %p49 = por %p47, %p48
      %p50 = scmp.ne.s32.totalorder %s39, %s42
      %p51 = scmp.eq.s32.totalorder %s22, 3
      %p52 = por %p50, %p51
      %p53 = scmp.ne.s32.totalorder %s42, %s43
      %p54 = scmp.eq.s32.totalorder %s22, 0
      %p55 = por %p53, %p54
      %p56 = scmp.ne.s32.totalorder %s42, %s43
      %p57 = scmp.eq.s32.totalorder %s23, 3
      %p58 = por %p56, %p57
      %p60 = scmp.ne.s32.totalorder %s43, %s59
      %p61 = scmp.eq.s32.totalorder %s23, 0
      %p62 = por %p60, %p61
      %s63 = ssub.s32 %s25, %s32
      %p64 = scmp.eq.s32.totalorder %s63, 0
      %s66 = sadd.s32 %s65, 1
      %s67 = scalar_select %p64, %s65, %s66
      %p70 = pneg %p64
      %p71 = scmp.eq.s32.totalorder %s17, 3
      %p72 = por %p70, %p71
      %p73 = scmp.ne.s32.totalorder %s65, %s68
      %p74 = scmp.eq.s32.totalorder %s17, 0
      %p75 = por %p73, %p74
      %p76 = scmp.ne.s32.totalorder %s65, %s68
      %p77 = scmp.eq.s32.totalorder %s22, 3
      %p78 = por %p76, %p77
      %p79 = scmp.ne.s32.totalorder %s68, %s69
      %p80 = scmp.eq.s32.totalorder %s22, 0
      %p81 = por %p79, %p80
      %p82 = scmp.ne.s32.totalorder %s68, %s69
      %p83 = scmp.eq.s32.totalorder %s23, 3
      %p84 = por %p82, %p83
      %p86 = scmp.ne.s32.totalorder %s69, %s85
      %p87 = scmp.eq.s32.totalorder %s23, 0
      %p88 = por %p86, %p87
      %s89 = ssub.s32 %s25, %s32
      %p90 = scmp.eq.s32.totalorder %s89, 0
      %s92 = sadd.s32 %s91, 1
      %s93 = scalar_select %p90, %s91, %s92
      %p96 = pneg %p90
      %p97 = scmp.eq.s32.totalorder %s17, 3
      %p98 = por %p96, %p97
      %p99 = scmp.ne.s32.totalorder %s91, %s94
      %p100 = scmp.eq.s32.totalorder %s17, 0
      %p101 = por %p99, %p100
      %p102 = scmp.ne.s32.totalorder %s91, %s94
      %p103 = scmp.eq.s32.totalorder %s22, 3
      %p104 = por %p102, %p103
      %p105 = scmp.ne.s32.totalorder %s94, %s95
      %p106 = scmp.eq.s32.totalorder %s22, 0
      %p107 = por %p105, %p106
      %p108 = scmp.ne.s32.totalorder %s94, %s95
      %p109 = scmp.eq.s32.totalorder %s23, 3
      %p110 = por %p108, %p109
      %p112 = scmp.ne.s32.totalorder %s95, %s111
      %p113 = scmp.eq.s32.totalorder %s23, 0
      %p114 = por %p112, %p113
      %s115 = ssub.s32 %s25, %s32
      %p116 = scmp.eq.s32.totalorder %s115, 0
      %s118 = sadd.s32 %s117, 1
      %s119 = scalar_select %p116, %s117, %s118
      %p122 = pneg %p116
      %p123 = scmp.eq.s32.totalorder %s17, 3
      %p124 = por %p122, %p123
      %p125 = scmp.ne.s32.totalorder %s117, %s120
      %p126 = scmp.eq.s32.totalorder %s17, 0
      %p127 = por %p125, %p126
      %p128 = scmp.ne.s32.totalorder %s117, %s120
      %p129 = scmp.eq.s32.totalorder %s22, 3
      %p130 = por %p128, %p129
      %p131 = scmp.ne.s32.totalorder %s120, %s121
      %p132 = scmp.eq.s32.totalorder %s22, 0
      %p133 = por %p131, %p132
      %p134 = scmp.ne.s32.totalorder %s120, %s121
      %p135 = scmp.eq.s32.totalorder %s23, 3
      %p136 = por %p134, %p135
      %p138 = scmp.ne.s32.totalorder %s121, %s137
      %p139 = scmp.eq.s32.totalorder %s23, 0
      %p140 = por %p138, %p139
      %s141 = ssub.s32 %s24, %s36
      %s142 = ssub.s32 %s25, %s32
      %s143 = sor.u32 %s141, %s142
      %p144 = scmp.eq.s32.totalorder %s143, 0
      %s146 = sadd.s32 %s145, 1
      %s147 = scalar_select %p144, %s145, %s146
      %p150 = pneg %p144
      %p151 = scmp.eq.s32.totalorder %s17, 3
      %p152 = por %p150, %p151
      %p153 = scmp.ne.s32.totalorder %s145, %s148
      %p154 = scmp.eq.s32.totalorder %s17, 0
      %p155 = por %p153, %p154
      %p156 = scmp.ne.s32.totalorder %s145, %s148
      %p157 = scmp.eq.s32.totalorder %s22, 3
      %p158 = por %p156, %p157
      %p159 = scmp.ne.s32.totalorder %s148, %s149
      %p160 = scmp.eq.s32.totalorder %s22, 0
      %p161 = por %p159, %p160
      %p162 = scmp.ne.s32.totalorder %s148, %s149
      %p163 = scmp.eq.s32.totalorder %s23, 3
      %p164 = por %p162, %p163
      %p166 = scmp.ne.s32.totalorder %s149, %s165
      %p167 = scmp.eq.s32.totalorder %s23, 0
      %p168 = por %p166, %p167
      %p169 = scmp.le.s32.totalorder 1, %s17
      %p170 = scmp.lt.s32.totalorder %s17, 5
      %p171 = pnand %p169, %p170
      %p172 = pneg %p171
      // Predicated region
      $region9: #{tpu_custom_call.1} parent=5 // pred_check
        _
      $region10: #{tpu_custom_call.1} parent=5 // pred_check_branch
        %174 = sbr.rel (%p171) target = $region12
      $region11: #{tpu_custom_call.1} parent=5 // pred_region
        %s175 = ssub.s32 %s17, 1
        // Predicated region
        $region13: #{tpu_custom_call.1} parent=11 // pred_check
          %p176 = pneg %p81
        $region14: #{tpu_custom_call.1} parent=11 // pred_check_branch
          %178 = sbr.rel (%p176) target = $region16
        $region15: #{tpu_custom_call.1} parent=11 // pred_region
          %180 = vsyncadd [#allocation6], 0
          %s181 = smul.addr %s27, 4
          %s182 = scalar_lea.hbm %s1, %s181
          %s183 = sshll.u32 %s182, 4
          %s184 = int_to_ptr.hbm [resolvable:$true] %s183
          %s185 = sshll.u32 [#allocation5], 4
          %s186 = int_to_ptr.vmem [resolvable:$true] %s185
          %191 = dma.hbm_to_vmem [thread:$0]  %s184, 2048, %s186, [#allocation6], 64, 64, 4
        $region16: #{tpu_custom_call.1} parent=11 // pred_fallthru
          _
        // Predicated region
        $region17: #{tpu_custom_call.1} parent=11 // pred_check
          %p192 = pneg %p107
        $region18: #{tpu_custom_call.1} parent=11 // pred_check_branch
          %194 = sbr.rel (%p192) target = $region20
        $region19: #{tpu_custom_call.1} parent=11 // pred_region
          %p195 = scmp.lt.s32.totalorder %s27, 0
          %s196 = scalar_select %p195, %s27, 0
          %s197 = scalar_lea.vmem %s2, %s196
        $region20: #{tpu_custom_call.1} parent=11 // pred_fallthru
          _
        // Predicated region
        $region21: #{tpu_custom_call.1} parent=11 // pred_check
          %p198 = pneg %p133
        $region22: #{tpu_custom_call.1} parent=11 // pred_check_branch
          %200 = sbr.rel (%p198) target = $region24
        $region23: #{tpu_custom_call.1} parent=11 // pred_region
          %p201 = scmp.lt.s32.totalorder %s27, 0
          %s202 = scalar_select %p201, %s27, 0
          %s203 = scalar_lea.vmem %s3, %s202
        $region24: #{tpu_custom_call.1} parent=11 // pred_fallthru
          _
      $region12: #{tpu_custom_call.1} parent=5 // pred_fallthru
        _
      %p204 = scmp.lt.s32.totalorder %s17, 4
      // Predicated region
      $region25: #{tpu_custom_call.1} parent=5 // pred_check
        %p205 = pneg %p204
      $region26: #{tpu_custom_call.1} parent=5 // pred_check_branch
        %207 = sbr.rel (%p205) target = $region28
      $region27: #{tpu_custom_call.1} parent=5 // pred_region
        // Predicated region
        $region29: #{tpu_custom_call.1} parent=27 // pred_check
          %p208 = pneg %p49
        $region30: #{tpu_custom_call.1} parent=27 // pred_check_branch
          %210 = sbr.rel (%p208) target = $region32
        $region31: #{tpu_custom_call.1} parent=27 // pred_region
          %s211 = sand.u32 %s39, 1
          %s212 = scalar_lea.sflag [#allocation3], %s211
          %s213 = sand.u32 %s39, 1
          %s214 = smul.addr %s213, 512
          %s215 = scalar_lea.vmem [#allocation2], %s214
          %s216 = smul.u32 64, %s24
          %218 = vsyncadd %s212, 0
          %s219 = smul.addr %s216, 2
          %s220 = smul.addr %s219, 4
          %s221 = scalar_lea.hbm %s0, %s220
          %s222 = sshll.u32 %s221, 4
          %s223 = int_to_ptr.hbm [resolvable:$true] %s222
          %s224 = sshll.u32 %s215, 4
          %s225 = int_to_ptr.vmem [resolvable:$true] %s224
          %230 = dma.hbm_to_vmem [thread:$0]  %s223, 8192, %s225, %s212, 128, 128, 8
        $region32: #{tpu_custom_call.1} parent=27 // pred_fallthru
          _
      $region28: #{tpu_custom_call.1} parent=5 // pred_fallthru
        _
      %p231 = scmp.le.s32.totalorder 1, %s17
      %p232 = scmp.lt.s32.totalorder %s17, 5
      %p233 = pnand %p231, %p232
      %p234 = pneg %p233
      // Predicated region
      $region33: #{tpu_custom_call.1} parent=5 // pred_check
        _
      $region34: #{tpu_custom_call.1} parent=5 // pred_check_branch
        %236 = sbr.rel (%p233) target = $region36
      $region35: #{tpu_custom_call.1} parent=5 // pred_region
        %s237 = ssub.s32 %s17, 1
        %s238 = sand.u32 %s42, 1
        %s239 = scalar_lea.sflag [#allocation3], %s238
        %s240 = sand.u32 %s42, 1
        %s241 = smul.addr %s240, 512
        %s242 = scalar_lea.vmem [#allocation2], %s241
        // Predicated region
        $region37: #{tpu_custom_call.1} parent=35 // pred_check
          %p243 = pneg %p55
        $region38: #{tpu_custom_call.1} parent=35 // pred_check_branch
          %245 = sbr.rel (%p243) target = $region40
        $region39: #{tpu_custom_call.1} parent=35 // pred_region
          %247 = dma.done %s239, 8192
        $region40: #{tpu_custom_call.1} parent=35 // pred_fallthru
          _
        // Predicated region
        $region41: #{tpu_custom_call.1} parent=35 // pred_check
          %p248 = pneg %p81
        $region42: #{tpu_custom_call.1} parent=35 // pred_check_branch
          %250 = sbr.rel (%p248) target = $region44
        $region43: #{tpu_custom_call.1} parent=35 // pred_region
          %252 = dma.done [#allocation6], 2048
        $region44: #{tpu_custom_call.1} parent=35 // pred_fallthru
          _
        %s253 = sand.u32 %s42, 1
        %s254 = scalar_lea.sflag [#allocation3], %s253
        %s255 = sand.u32 %s42, 1
        %s256 = smul.addr %s255, 512
        %s257 = scalar_lea.vmem [#allocation2], %s256
        %p258 = pneg %p55
        %p259 = pneg %p52
        %p260 = pneg %p81
        %p261 = pneg %p78
        %p262 = scmp.lt.s32.totalorder %s27, 0
        %s263 = scalar_select %p262, %s27, 0
        %s264 = scalar_lea.vmem %s2, %s263
        %p265 = pneg %p107
        %p266 = pneg %p104
        %p267 = scmp.lt.s32.totalorder %s27, 0
        %s268 = scalar_select %p267, %s27, 0
        %s269 = scalar_lea.vmem %s3, %s268
        %p270 = pneg %p133
        %p271 = pneg %p130
        %p272 = pneg %p161
        %p273 = pneg %p158
        %s274 = sand.u32 %s148, 1
        %s275 = scalar_lea.sflag [#allocation4], %s274
        %s276 = sand.u32 %s148, 1
        %s277 = smul.addr %s276, 256
        %s278 = scalar_lea.vmem [#allocation7], %s277
        %s279 = smul.u32 64, %s26
        %p280 = scmp.lt.s32.totalorder %s27, 0
        %s281 = scalar_select %p280, %s27, 0
        %s282 = scalar_lea.vmem %s2, %s281
        %p283 = scmp.lt.s32.totalorder %s27, 0
        %s284 = scalar_select %p283, %s27, 0
        %s285 = scalar_lea.vmem %s3, %s284
        %s286 = smul.u32 64, %s26
        %v287 = vld [vmem:[%s242] sm:$0xff]
        %v288 = vld [vmem:[%s242 + $0x8] sm:$0xff]
        %v289 = vld [vmem:[%s242 + $0x10] sm:$0xff]
        %v290 = vld [vmem:[%s242 + $0x18] sm:$0xff]
        %v291 = vld [vmem:[%s242 + $0x20] sm:$0xff]
        %v292 = vld [vmem:[%s242 + $0x28] sm:$0xff]
        %v293 = vld [vmem:[%s242 + $0x30] sm:$0xff]
        %v294 = vld [vmem:[%s242 + $0x38] sm:$0xff]
        %v295 = vld [vmem:[%s242 + $0x40] sm:$0xff]
        %v296 = vld [vmem:[%s242 + $0x48] sm:$0xff]
        %v297 = vld [vmem:[%s242 + $0x50] sm:$0xff]
        %v298 = vld [vmem:[%s242 + $0x58] sm:$0xff]
        %v299 = vld [vmem:[%s242 + $0x60] sm:$0xff]
        %v300 = vld [vmem:[%s242 + $0x68] sm:$0xff]
        %v301 = vld [vmem:[%s242 + $0x70] sm:$0xff]
        %v302 = vld [vmem:[%s242 + $0x78] sm:$0xff]
        %v303 = vld [vmem:[%s242 + $0x80] sm:$0xff]
        %v304 = vld [vmem:[%s242 + $0x88] sm:$0xff]
        %v305 = vld [vmem:[%s242 + $0x90] sm:$0xff]
        %v306 = vld [vmem:[%s242 + $0x98] sm:$0xff]
        %v307 = vld [vmem:[%s242 + $0xa0] sm:$0xff]
        %v308 = vld [vmem:[%s242 + $0xa8] sm:$0xff]
        %v309 = vld [vmem:[%s242 + $0xb0] sm:$0xff]
        %v310 = vld [vmem:[%s242 + $0xb8] sm:$0xff]
        %v311 = vld [vmem:[%s242 + $0xc0] sm:$0xff]
        %v312 = vld [vmem:[%s242 + $0xc8] sm:$0xff]
        %v313 = vld [vmem:[%s242 + $0xd0] sm:$0xff]
        %v314 = vld [vmem:[%s242 + $0xd8] sm:$0xff]
        %v315 = vld [vmem:[%s242 + $0xe0] sm:$0xff]
        %v316 = vld [vmem:[%s242 + $0xe8] sm:$0xff]
        %v317 = vld [vmem:[%s242 + $0xf0] sm:$0xff]
        %v318 = vld [vmem:[%s242 + $0xf8] sm:$0xff]
        %v319 = vld [vmem:[%s242 + $0x100] sm:$0xff]
        %v320 = vld [vmem:[%s242 + $0x108] sm:$0xff]
        %v321 = vld [vmem:[%s242 + $0x110] sm:$0xff]
        %v322 = vld [vmem:[%s242 + $0x118] sm:$0xff]
        %v323 = vld [vmem:[%s242 + $0x120] sm:$0xff]
        %v324 = vld [vmem:[%s242 + $0x128] sm:$0xff]
        %v325 = vld [vmem:[%s242 + $0x130] sm:$0xff]
        %v326 = vld [vmem:[%s242 + $0x138] sm:$0xff]
        %v327 = vld [vmem:[%s242 + $0x140] sm:$0xff]
        %v328 = vld [vmem:[%s242 + $0x148] sm:$0xff]
        %v329 = vld [vmem:[%s242 + $0x150] sm:$0xff]
        %v330 = vld [vmem:[%s242 + $0x158] sm:$0xff]
        %v331 = vld [vmem:[%s242 + $0x160] sm:$0xff]
        %v332 = vld [vmem:[%s242 + $0x168] sm:$0xff]
        %v333 = vld [vmem:[%s242 + $0x170] sm:$0xff]
        %v334 = vld [vmem:[%s242 + $0x178] sm:$0xff]
        %v335 = vld [vmem:[%s242 + $0x180] sm:$0xff]
        %v336 = vld [vmem:[%s242 + $0x188] sm:$0xff]
        %v337 = vld [vmem:[%s242 + $0x190] sm:$0xff]
        %v338 = vld [vmem:[%s242 + $0x198] sm:$0xff]
        %v339 = vld [vmem:[%s242 + $0x1a0] sm:$0xff]
        %v340 = vld [vmem:[%s242 + $0x1a8] sm:$0xff]
        %v341 = vld [vmem:[%s242 + $0x1b0] sm:$0xff]
        %v342 = vld [vmem:[%s242 + $0x1b8] sm:$0xff]
        %v343 = vld [vmem:[%s242 + $0x1c0] sm:$0xff]
        %v344 = vld [vmem:[%s242 + $0x1c8] sm:$0xff]
        %v345 = vld [vmem:[%s242 + $0x1d0] sm:$0xff]
        %v346 = vld [vmem:[%s242 + $0x1d8] sm:$0xff]
        %v347 = vld [vmem:[%s242 + $0x1e0] sm:$0xff]
        %v348 = vld [vmem:[%s242 + $0x1e8] sm:$0xff]
        %v349 = vld [vmem:[%s242 + $0x1f0] sm:$0xff]
        %v350 = vld [vmem:[%s242 + $0x1f8] sm:$0xff]
        %v351 = vld [vmem:[#allocation5] sm:$0xf]
        %v352 = vld [vmem:[#allocation5 + $0x4] sm:$0xf]
        %v353 = vld [vmem:[#allocation5 + $0x8] sm:$0xf]
        %v354 = vld [vmem:[#allocation5 + $0xc] sm:$0xf]
        %v355 = vld [vmem:[#allocation5 + $0x10] sm:$0xf]
        %v356 = vld [vmem:[#allocation5 + $0x14] sm:$0xf]
        %v357 = vld [vmem:[#allocation5 + $0x18] sm:$0xf]
        %v358 = vld [vmem:[#allocation5 + $0x1c] sm:$0xf]
        %v359 = vld [vmem:[#allocation5 + $0x20] sm:$0xf]
        %v360 = vld [vmem:[#allocation5 + $0x24] sm:$0xf]
        %v361 = vld [vmem:[#allocation5 + $0x28] sm:$0xf]
        %v362 = vld [vmem:[#allocation5 + $0x2c] sm:$0xf]
        %v363 = vld [vmem:[#allocation5 + $0x30] sm:$0xf]
        %v364 = vld [vmem:[#allocation5 + $0x34] sm:$0xf]
        %v365 = vld [vmem:[#allocation5 + $0x38] sm:$0xf]
        %v366 = vld [vmem:[#allocation5 + $0x3c] sm:$0xf]
        %v367 = vld [vmem:[#allocation5 + $0x40] sm:$0xf]
        %v368 = vld [vmem:[#allocation5 + $0x44] sm:$0xf]
        %v369 = vld [vmem:[#allocation5 + $0x48] sm:$0xf]
        %v370 = vld [vmem:[#allocation5 + $0x4c] sm:$0xf]
        %v371 = vld [vmem:[#allocation5 + $0x50] sm:$0xf]
        %v372 = vld [vmem:[#allocation5 + $0x54] sm:$0xf]
        %v373 = vld [vmem:[#allocation5 + $0x58] sm:$0xf]
        %v374 = vld [vmem:[#allocation5 + $0x5c] sm:$0xf]
        %v375 = vld [vmem:[#allocation5 + $0x60] sm:$0xf]
        %v376 = vld [vmem:[#allocation5 + $0x64] sm:$0xf]
        %v377 = vld [vmem:[#allocation5 + $0x68] sm:$0xf]
        %v378 = vld [vmem:[#allocation5 + $0x6c] sm:$0xf]
        %v379 = vld [vmem:[#allocation5 + $0x70] sm:$0xf]
        %v380 = vld [vmem:[#allocation5 + $0x74] sm:$0xf]
        %v381 = vld [vmem:[#allocation5 + $0x78] sm:$0xf]
        %v382 = vld [vmem:[#allocation5 + $0x7c] sm:$0xf]
        %v447 = vunpack.c.l.b16 %v287
        %v448 = vunpack.c.h.b16 %v287
        %v449 = vunpack.c.l.b16 %v288
        %v450 = vunpack.c.h.b16 %v288
        %v451 = vunpack.c.l.b16 %v289
        %v452 = vunpack.c.h.b16 %v289
        %v453 = vunpack.c.l.b16 %v290
        %v454 = vunpack.c.h.b16 %v290
        %v455 = vunpack.c.l.b16 %v291
        %v456 = vunpack.c.h.b16 %v291
        %v457 = vunpack.c.l.b16 %v292
        %v458 = vunpack.c.h.b16 %v292
        %v459 = vunpack.c.l.b16 %v293
        %v460 = vunpack.c.h.b16 %v293
        %v461 = vunpack.c.l.b16 %v294
        %v462 = vunpack.c.h.b16 %v294
        %v463 = vunpack.c.l.b16 %v295
        %v464 = vunpack.c.h.b16 %v295
        %v465 = vunpack.c.l.b16 %v296
        %v466 = vunpack.c.h.b16 %v296
        %v467 = vunpack.c.l.b16 %v297
        %v468 = vunpack.c.h.b16 %v297
        %v469 = vunpack.c.l.b16 %v298
        %v470 = vunpack.c.h.b16 %v298
        %v471 = vunpack.c.l.b16 %v299
        %v472 = vunpack.c.h.b16 %v299
        %v473 = vunpack.c.l.b16 %v300
        %v474 = vunpack.c.h.b16 %v300
        %v475 = vunpack.c.l.b16 %v301
        %v476 = vunpack.c.h.b16 %v301
        %v477 = vunpack.c.l.b16 %v302
        %v478 = vunpack.c.h.b16 %v302
        %v479 = vunpack.c.l.b16 %v303
        %v480 = vunpack.c.h.b16 %v303
        %v481 = vunpack.c.l.b16 %v304
        %v482 = vunpack.c.h.b16 %v304
        %v483 = vunpack.c.l.b16 %v305
        %v484 = vunpack.c.h.b16 %v305
        %v485 = vunpack.c.l.b16 %v306
        %v486 = vunpack.c.h.b16 %v306
        %v487 = vunpack.c.l.b16 %v307
        %v488 = vunpack.c.h.b16 %v307
        %v489 = vunpack.c.l.b16 %v308
        %v490 = vunpack.c.h.b16 %v308
        %v491 = vunpack.c.l.b16 %v309
        %v492 = vunpack.c.h.b16 %v309
        %v493 = vunpack.c.l.b16 %v310
        %v494 = vunpack.c.h.b16 %v310
        %v495 = vunpack.c.l.b16 %v311
        %v496 = vunpack.c.h.b16 %v311
        %v497 = vunpack.c.l.b16 %v312
        %v498 = vunpack.c.h.b16 %v312
        %v499 = vunpack.c.l.b16 %v313
        %v500 = vunpack.c.h.b16 %v313
        %v501 = vunpack.c.l.b16 %v314
        %v502 = vunpack.c.h.b16 %v314
        %v503 = vunpack.c.l.b16 %v315
        %v504 = vunpack.c.h.b16 %v315
        %v505 = vunpack.c.l.b16 %v316
        %v506 = vunpack.c.h.b16 %v316
        %v507 = vunpack.c.l.b16 %v317
        %v508 = vunpack.c.h.b16 %v317
        %v509 = vunpack.c.l.b16 %v318
        %v510 = vunpack.c.h.b16 %v318
        %v511 = vunpack.c.l.b16 %v319
        %v512 = vunpack.c.h.b16 %v319
        %v513 = vunpack.c.l.b16 %v320
        %v514 = vunpack.c.h.b16 %v320
        %v515 = vunpack.c.l.b16 %v321
        %v516 = vunpack.c.h.b16 %v321
        %v517 = vunpack.c.l.b16 %v322
        %v518 = vunpack.c.h.b16 %v322
        %v519 = vunpack.c.l.b16 %v323
        %v520 = vunpack.c.h.b16 %v323
        %v521 = vunpack.c.l.b16 %v324
        %v522 = vunpack.c.h.b16 %v324
        %v523 = vunpack.c.l.b16 %v325
        %v524 = vunpack.c.h.b16 %v325
        %v525 = vunpack.c.l.b16 %v326
        %v526 = vunpack.c.h.b16 %v326
        %v527 = vunpack.c.l.b16 %v327
        %v528 = vunpack.c.h.b16 %v327
        %v529 = vunpack.c.l.b16 %v328
        %v530 = vunpack.c.h.b16 %v328
        %v531 = vunpack.c.l.b16 %v329
        %v532 = vunpack.c.h.b16 %v329
        %v533 = vunpack.c.l.b16 %v330
        %v534 = vunpack.c.h.b16 %v330
        %v535 = vunpack.c.l.b16 %v331
        %v536 = vunpack.c.h.b16 %v331
        %v537 = vunpack.c.l.b16 %v332
        %v538 = vunpack.c.h.b16 %v332
        %v539 = vunpack.c.l.b16 %v333
        %v540 = vunpack.c.h.b16 %v333
        %v541 = vunpack.c.l.b16 %v334
        %v542 = vunpack.c.h.b16 %v334
        %v543 = vunpack.c.l.b16 %v335
        %v544 = vunpack.c.h.b16 %v335
        %v545 = vunpack.c.l.b16 %v336
        %v546 = vunpack.c.h.b16 %v336
        %v547 = vunpack.c.l.b16 %v337
        %v548 = vunpack.c.h.b16 %v337
        %v549 = vunpack.c.l.b16 %v338
        %v550 = vunpack.c.h.b16 %v338
        %v551 = vunpack.c.l.b16 %v339
        %v552 = vunpack.c.h.b16 %v339
        %v553 = vunpack.c.l.b16 %v340
        %v554 = vunpack.c.h.b16 %v340
        %v555 = vunpack.c.l.b16 %v341
        %v556 = vunpack.c.h.b16 %v341
        %v557 = vunpack.c.l.b16 %v342
        %v558 = vunpack.c.h.b16 %v342
        %v559 = vunpack.c.l.b16 %v343
        %v560 = vunpack.c.h.b16 %v343
        %v561 = vunpack.c.l.b16 %v344
        %v562 = vunpack.c.h.b16 %v344
        %v563 = vunpack.c.l.b16 %v345
        %v564 = vunpack.c.h.b16 %v345
        %v565 = vunpack.c.l.b16 %v346
        %v566 = vunpack.c.h.b16 %v346
        %v567 = vunpack.c.l.b16 %v347
        %v568 = vunpack.c.h.b16 %v347
        %v569 = vunpack.c.l.b16 %v348
        %v570 = vunpack.c.h.b16 %v348
        %v571 = vunpack.c.l.b16 %v349
        %v572 = vunpack.c.h.b16 %v349
        %v573 = vunpack.c.l.b16 %v350
        %v574 = vunpack.c.h.b16 %v350
        %v575 = vpack.c.b16 %v449, %v447
        %v576 = vpack.c.b16 %v450, %v448
        %v577 = vpack.c.b16 %v453, %v451
        %v578 = vpack.c.b16 %v454, %v452
        %v579 = vpack.c.b16 %v457, %v455
        %v580 = vpack.c.b16 %v458, %v456
        %v581 = vpack.c.b16 %v461, %v459
        %v582 = vpack.c.b16 %v462, %v460
        %v583 = vpack.c.b16 %v465, %v463
        %v584 = vpack.c.b16 %v466, %v464
        %v585 = vpack.c.b16 %v469, %v467
        %v586 = vpack.c.b16 %v470, %v468
        %v587 = vpack.c.b16 %v473, %v471
        %v588 = vpack.c.b16 %v474, %v472
        %v589 = vpack.c.b16 %v477, %v475
        %v590 = vpack.c.b16 %v478, %v476
        %v591 = vpack.c.b16 %v481, %v479
        %v592 = vpack.c.b16 %v482, %v480
        %v593 = vpack.c.b16 %v485, %v483
        %v594 = vpack.c.b16 %v486, %v484
        %v595 = vpack.c.b16 %v489, %v487
        %v596 = vpack.c.b16 %v490, %v488
        %v597 = vpack.c.b16 %v493, %v491
        %v598 = vpack.c.b16 %v494, %v492
        %v599 = vpack.c.b16 %v497, %v495
        %v600 = vpack.c.b16 %v498, %v496
        %v601 = vpack.c.b16 %v501, %v499
        %v602 = vpack.c.b16 %v502, %v500
        %v603 = vpack.c.b16 %v505, %v503
        %v604 = vpack.c.b16 %v506, %v504
        %v605 = vpack.c.b16 %v509, %v507
        %v606 = vpack.c.b16 %v510, %v508
        %v607 = vpack.c.b16 %v513, %v511
        %v608 = vpack.c.b16 %v514, %v512
        %v609 = vpack.c.b16 %v517, %v515
        %v610 = vpack.c.b16 %v518, %v516
        %v611 = vpack.c.b16 %v521, %v519
        %v612 = vpack.c.b16 %v522, %v520
        %v613 = vpack.c.b16 %v525, %v523
        %v614 = vpack.c.b16 %v526, %v524
        %v615 = vpack.c.b16 %v529, %v527
        %v616 = vpack.c.b16 %v530, %v528
        %v617 = vpack.c.b16 %v533, %v531
        %v618 = vpack.c.b16 %v534, %v532
        %v619 = vpack.c.b16 %v537, %v535
        %v620 = vpack.c.b16 %v538, %v536
        %v621 = vpack.c.b16 %v541, %v539
        %v622 = vpack.c.b16 %v542, %v540
        %v623 = vpack.c.b16 %v545, %v543
        %v624 = vpack.c.b16 %v546, %v544
        %v625 = vpack.c.b16 %v549, %v547
        %v626 = vpack.c.b16 %v550, %v548
        %v627 = vpack.c.b16 %v553, %v551
        %v628 = vpack.c.b16 %v554, %v552
        %v629 = vpack.c.b16 %v557, %v555
        %v630 = vpack.c.b16 %v558, %v556
        %v631 = vpack.c.b16 %v561, %v559
        %v632 = vpack.c.b16 %v562, %v560
        %v633 = vpack.c.b16 %v565, %v563
        %v634 = vpack.c.b16 %v566, %v564
        %v635 = vpack.c.b16 %v569, %v567
        %v636 = vpack.c.b16 %v570, %v568
        %v637 = vpack.c.b16 %v573, %v571
        %v638 = vpack.c.b16 %v574, %v572
        %v735 = vunpack.c.l.b16 %v351
        %v736 = vunpack.c.l.b16 %v352
        %v737 = vunpack.c.l.b16 %v353
        %v738 = vunpack.c.l.b16 %v354
        %v739 = vunpack.c.l.b16 %v355
        %v740 = vunpack.c.l.b16 %v356
        %v741 = vunpack.c.l.b16 %v357
        %v742 = vunpack.c.l.b16 %v358
        %v743 = vunpack.c.l.b16 %v359
        %v744 = vunpack.c.l.b16 %v360
        %v745 = vunpack.c.l.b16 %v361
        %v746 = vunpack.c.l.b16 %v362
        %v747 = vunpack.c.l.b16 %v363
        %v748 = vunpack.c.l.b16 %v364
        %v749 = vunpack.c.l.b16 %v365
        %v750 = vunpack.c.l.b16 %v366
        %v751 = vunpack.c.l.b16 %v367
        %v752 = vunpack.c.l.b16 %v368
        %v753 = vunpack.c.l.b16 %v369
        %v754 = vunpack.c.l.b16 %v370
        %v755 = vunpack.c.l.b16 %v371
        %v756 = vunpack.c.l.b16 %v372
        %v757 = vunpack.c.l.b16 %v373
        %v758 = vunpack.c.l.b16 %v374
        %v759 = vunpack.c.l.b16 %v375
        %v760 = vunpack.c.l.b16 %v376
        %v761 = vunpack.c.l.b16 %v377
        %v762 = vunpack.c.l.b16 %v378
        %v763 = vunpack.c.l.b16 %v379
        %v764 = vunpack.c.l.b16 %v380
        %v765 = vunpack.c.l.b16 %v381
        %v766 = vunpack.c.l.b16 %v382
        %v767 = vpack.c.b16 %v736, %v735
        %v768 = vpack.c.b16 %v738, %v737
        %v769 = vpack.c.b16 %v740, %v739
        %v770 = vpack.c.b16 %v742, %v741
        %v771 = vpack.c.b16 %v744, %v743
        %v772 = vpack.c.b16 %v746, %v745
        %v773 = vpack.c.b16 %v748, %v747
        %v774 = vpack.c.b16 %v750, %v749
        %v775 = vpack.c.b16 %v752, %v751
        %v776 = vpack.c.b16 %v754, %v753
        %v777 = vpack.c.b16 %v756, %v755
        %v778 = vpack.c.b16 %v758, %v757
        %v779 = vpack.c.b16 %v760, %v759
        %v780 = vpack.c.b16 %v762, %v761
        %v781 = vpack.c.b16 %v764, %v763
        %v782 = vpack.c.b16 %v766, %v765
        %799 = vmatpush.bf16.msra.mxu0 %v774
        %800 = vmatpush.bf16.msra.mxu0 %v773
        %801 = vmatpush.bf16.msra.mxu0 %v772
        %802 = vmatpush.bf16.msra.mxu0 %v771
        %803 = vmatpush.bf16.msra.mxu0 %v770
        %804 = vmatpush.bf16.msra.mxu0 %v769
        %805 = vmatpush.bf16.msra.mxu0 %v768
        %806 = vmatpush.bf16.msra.mxu0 %v767
        %807 = vmatmul.bf16.gmra.mxu0 %v575
        %v808 = vpop.f32.mrf.mxu0
        %v809 = vadd.f32 0.0, %v808
        %v810 = vpop.f32.mrf.mxu0
        %v811 = vadd.f32 0.0, %v810
        %812 = vmatmul.bf16.gmra.mxu0 %v577
        %v813 = vpop.f32.mrf.mxu0
        %v814 = vadd.f32 0.0, %v813
        %v815 = vpop.f32.mrf.mxu0
        %v816 = vadd.f32 0.0, %v815
        %817 = vmatmul.bf16.gmra.mxu0 %v579
        %v818 = vpop.f32.mrf.mxu0
        %v819 = vadd.f32 0.0, %v818
        %v820 = vpop.f32.mrf.mxu0
        %v821 = vadd.f32 0.0, %v820
        %822 = vmatmul.bf16.gmra.mxu0 %v581
        %v823 = vpop.f32.mrf.mxu0
        %v824 = vadd.f32 0.0, %v823
        %v825 = vpop.f32.mrf.mxu0
        %v826 = vadd.f32 0.0, %v825
        %827 = vmatmul.bf16.gmra.mxu0 %v583
        %v828 = vpop.f32.mrf.mxu0
        %v829 = vadd.f32 0.0, %v828
        %v830 = vpop.f32.mrf.mxu0
        %v831 = vadd.f32 0.0, %v830
        %832 = vmatmul.bf16.gmra.mxu0 %v585
        %v833 = vpop.f32.mrf.mxu0
        %v834 = vadd.f32 0.0, %v833
        %v835 = vpop.f32.mrf.mxu0
        %v836 = vadd.f32 0.0, %v835
        %837 = vmatmul.bf16.gmra.mxu0 %v587
        %v838 = vpop.f32.mrf.mxu0
        %v839 = vadd.f32 0.0, %v838
        %v840 = vpop.f32.mrf.mxu0
        %v841 = vadd.f32 0.0, %v840
        %842 = vmatmul.bf16.gmra.mxu0 %v589
        %v843 = vpop.f32.mrf.mxu0
        %v844 = vadd.f32 0.0, %v843
        %v845 = vpop.f32.mrf.mxu0
        %v846 = vadd.f32 0.0, %v845
        %847 = vmatmul.bf16.gmra.mxu0 %v591
        %v848 = vpop.f32.mrf.mxu0
        %v849 = vadd.f32 0.0, %v848
        %v850 = vpop.f32.mrf.mxu0
        %v851 = vadd.f32 0.0, %v850
        %852 = vmatmul.bf16.gmra.mxu0 %v593
        %v853 = vpop.f32.mrf.mxu0
        %v854 = vadd.f32 0.0, %v853
        %v855 = vpop.f32.mrf.mxu0
        %v856 = vadd.f32 0.0, %v855
        %857 = vmatmul.bf16.gmra.mxu0 %v595
        %v858 = vpop.f32.mrf.mxu0
        %v859 = vadd.f32 0.0, %v858
        %v860 = vpop.f32.mrf.mxu0
        %v861 = vadd.f32 0.0, %v860
        %862 = vmatmul.bf16.gmra.mxu0 %v597
        %v863 = vpop.f32.mrf.mxu0
        %v864 = vadd.f32 0.0, %v863
        %v865 = vpop.f32.mrf.mxu0
        %v866 = vadd.f32 0.0, %v865
        %867 = vmatmul.bf16.gmra.mxu0 %v599
        %v868 = vpop.f32.mrf.mxu0
        %v869 = vadd.f32 0.0, %v868
        %v870 = vpop.f32.mrf.mxu0
        %v871 = vadd.f32 0.0, %v870
        %872 = vmatmul.bf16.gmra.mxu0 %v601
        %v873 = vpop.f32.mrf.mxu0
        %v874 = vadd.f32 0.0, %v873
        %v875 = vpop.f32.mrf.mxu0
        %v876 = vadd.f32 0.0, %v875
        %877 = vmatmul.bf16.gmra.mxu0 %v603
        %v878 = vpop.f32.mrf.mxu0
        %v879 = vadd.f32 0.0, %v878
        %v880 = vpop.f32.mrf.mxu0
        %v881 = vadd.f32 0.0, %v880
        %882 = vmatmul.bf16.gmra.mxu0 %v605
        %v883 = vpop.f32.mrf.mxu0
        %v884 = vadd.f32 0.0, %v883
        %v885 = vpop.f32.mrf.mxu0
        %v886 = vadd.f32 0.0, %v885
        %887 = vmatmul.bf16.gmra.mxu0 %v607
        %v888 = vpop.f32.mrf.mxu0
        %v889 = vadd.f32 0.0, %v888
        %v890 = vpop.f32.mrf.mxu0
        %v891 = vadd.f32 0.0, %v890
        %892 = vmatmul.bf16.gmra.mxu0 %v609
        %v893 = vpop.f32.mrf.mxu0
        %v894 = vadd.f32 0.0, %v893
        %v895 = vpop.f32.mrf.mxu0
        %v896 = vadd.f32 0.0, %v895
        %897 = vmatmul.bf16.gmra.mxu0 %v611
        %v898 = vpop.f32.mrf.mxu0
        %v899 = vadd.f32 0.0, %v898
        %v900 = vpop.f32.mrf.mxu0
        %v901 = vadd.f32 0.0, %v900
        %902 = vmatmul.bf16.gmra.mxu0 %v613
        %v903 = vpop.f32.mrf.mxu0
        %v904 = vadd.f32 0.0, %v903
        %v905 = vpop.f32.mrf.mxu0
        %v906 = vadd.f32 0.0, %v905
        %907 = vmatmul.bf16.gmra.mxu0 %v615
        %v908 = vpop.f32.mrf.mxu0
        %v909 = vadd.f32 0.0, %v908
        %v910 = vpop.f32.mrf.mxu0
        %v911 = vadd.f32 0.0, %v910
        %912 = vmatmul.bf16.gmra.mxu0 %v617
        %v913 = vpop.f32.mrf.mxu0
        %v914 = vadd.f32 0.0, %v913
        %v915 = vpop.f32.mrf.mxu0
        %v916 = vadd.f32 0.0, %v915
        %917 = vmatmul.bf16.gmra.mxu0 %v619
        %v918 = vpop.f32.mrf.mxu0
        %v919 = vadd.f32 0.0, %v918
        %v920 = vpop.f32.mrf.mxu0
        %v921 = vadd.f32 0.0, %v920
        %922 = vmatmul.bf16.gmra.mxu0 %v621
        %v923 = vpop.f32.mrf.mxu0
        %v924 = vadd.f32 0.0, %v923
        %v925 = vpop.f32.mrf.mxu0
        %v926 = vadd.f32 0.0, %v925
        %927 = vmatmul.bf16.gmra.mxu0 %v623
        %v928 = vpop.f32.mrf.mxu0
        %v929 = vadd.f32 0.0, %v928
        %v930 = vpop.f32.mrf.mxu0
        %v931 = vadd.f32 0.0, %v930
        %932 = vmatmul.bf16.gmra.mxu0 %v625
        %v933 = vpop.f32.mrf.mxu0
        %v934 = vadd.f32 0.0, %v933
        %v935 = vpop.f32.mrf.mxu0
        %v936 = vadd.f32 0.0, %v935
        %937 = vmatmul.bf16.gmra.mxu0 %v627
        %v938 = vpop.f32.mrf.mxu0
        %v939 = vadd.f32 0.0, %v938
        %v940 = vpop.f32.mrf.mxu0
        %v941 = vadd.f32 0.0, %v940
        %942 = vmatmul.bf16.gmra.mxu0 %v629
        %v943 = vpop.f32.mrf.mxu0
        %v944 = vadd.f32 0.0, %v943
        %v945 = vpop.f32.mrf.mxu0
        %v946 = vadd.f32 0.0, %v945
        %947 = vmatmul.bf16.gmra.mxu0 %v631
        %v948 = vpop.f32.mrf.mxu0
        %v949 = vadd.f32 0.0, %v948
        %v950 = vpop.f32.mrf.mxu0
        %v951 = vadd.f32 0.0, %v950
        %952 = vmatmul.bf16.gmra.mxu0 %v633
        %v953 = vpop.f32.mrf.mxu0
        %v954 = vadd.f32 0.0, %v953
        %v955 = vpop.f32.mrf.mxu0
        %v956 = vadd.f32 0.0, %v955
        %957 = vmatmul.bf16.gmra.mxu0 %v635
        %v958 = vpop.f32.mrf.mxu0
        %v959 = vadd.f32 0.0, %v958
        %v960 = vpop.f32.mrf.mxu0
        %v961 = vadd.f32 0.0, %v960
        %962 = vmatmul.bf16.gmra.mxu0 %v637
        %v963 = vpop.f32.mrf.mxu0
        %v964 = vadd.f32 0.0, %v963
        %v965 = vpop.f32.mrf.mxu0
        %v966 = vadd.f32 0.0, %v965
        %967 = vdwg.mxu0
        %968 = vmatpush.bf16.msra.mxu0 %v782
        %969 = vmatpush.bf16.msra.mxu0 %v781
        %970 = vmatpush.bf16.msra.mxu0 %v780
        %971 = vmatpush.bf16.msra.mxu0 %v779
        %972 = vmatpush.bf16.msra.mxu0 %v778
        %973 = vmatpush.bf16.msra.mxu0 %v777
        %974 = vmatpush.bf16.msra.mxu0 %v776
        %975 = vmatpush.bf16.msra.mxu0 %v775
        %976 = vmatmul.bf16.gmra.mxu0 %v576
        %v977 = vpop.f32.mrf.mxu0
        %v978 = vadd.f32 %v809, %v977
        %v979 = vpop.f32.mrf.mxu0
        %v980 = vadd.f32 %v811, %v979
        %981 = vmatmul.bf16.gmra.mxu0 %v578
        %v982 = vpop.f32.mrf.mxu0
        %v983 = vadd.f32 %v814, %v982
        %v984 = vpop.f32.mrf.mxu0
        %v985 = vadd.f32 %v816, %v984
        %986 = vmatmul.bf16.gmra.mxu0 %v580
        %v987 = vpop.f32.mrf.mxu0
        %v988 = vadd.f32 %v819, %v987
        %v989 = vpop.f32.mrf.mxu0
        %v990 = vadd.f32 %v821, %v989
        %991 = vmatmul.bf16.gmra.mxu0 %v582
        %v992 = vpop.f32.mrf.mxu0
        %v993 = vadd.f32 %v824, %v992
        %v994 = vpop.f32.mrf.mxu0
        %v995 = vadd.f32 %v826, %v994
        %996 = vmatmul.bf16.gmra.mxu0 %v584
        %v997 = vpop.f32.mrf.mxu0
        %v998 = vadd.f32 %v829, %v997
        %v999 = vpop.f32.mrf.mxu0
        %v1000 = vadd.f32 %v831, %v999
        %1001 = vmatmul.bf16.gmra.mxu0 %v586
        %v1002 = vpop.f32.mrf.mxu0
        %v1003 = vadd.f32 %v834, %v1002
        %v1004 = vpop.f32.mrf.mxu0
        %v1005 = vadd.f32 %v836, %v1004
        %1006 = vmatmul.bf16.gmra.mxu0 %v588
        %v1007 = vpop.f32.mrf.mxu0
        %v1008 = vadd.f32 %v839, %v1007
        %v1009 = vpop.f32.mrf.mxu0
        %v1010 = vadd.f32 %v841, %v1009
        %1011 = vmatmul.bf16.gmra.mxu0 %v590
        %v1012 = vpop.f32.mrf.mxu0
        %v1013 = vadd.f32 %v844, %v1012
        %v1014 = vpop.f32.mrf.mxu0
        %v1015 = vadd.f32 %v846, %v1014
        %1016 = vmatmul.bf16.gmra.mxu0 %v592
        %v1017 = vpop.f32.mrf.mxu0
        %v1018 = vadd.f32 %v849, %v1017
        %v1019 = vpop.f32.mrf.mxu0
        %v1020 = vadd.f32 %v851, %v1019
        %1021 = vmatmul.bf16.gmra.mxu0 %v594
        %v1022 = vpop.f32.mrf.mxu0
        %v1023 = vadd.f32 %v854, %v1022
        %v1024 = vpop.f32.mrf.mxu0
        %v1025 = vadd.f32 %v856, %v1024
        %1026 = vmatmul.bf16.gmra.mxu0 %v596
        %v1027 = vpop.f32.mrf.mxu0
        %v1028 = vadd.f32 %v859, %v1027
        %v1029 = vpop.f32.mrf.mxu0
        %v1030 = vadd.f32 %v861, %v1029
        %1031 = vmatmul.bf16.gmra.mxu0 %v598
        %v1032 = vpop.f32.mrf.mxu0
        %v1033 = vadd.f32 %v864, %v1032
        %v1034 = vpop.f32.mrf.mxu0
        %v1035 = vadd.f32 %v866, %v1034
        %1036 = vmatmul.bf16.gmra.mxu0 %v600
        %v1037 = vpop.f32.mrf.mxu0
        %v1038 = vadd.f32 %v869, %v1037
        %v1039 = vpop.f32.mrf.mxu0
        %v1040 = vadd.f32 %v871, %v1039
        %1041 = vmatmul.bf16.gmra.mxu0 %v602
        %v1042 = vpop.f32.mrf.mxu0
        %v1043 = vadd.f32 %v874, %v1042
        %v1044 = vpop.f32.mrf.mxu0
        %v1045 = vadd.f32 %v876, %v1044
        %1046 = vmatmul.bf16.gmra.mxu0 %v604
        %v1047 = vpop.f32.mrf.mxu0
        %v1048 = vadd.f32 %v879, %v1047
        %v1049 = vpop.f32.mrf.mxu0
        %v1050 = vadd.f32 %v881, %v1049
        %1051 = vmatmul.bf16.gmra.mxu0 %v606
        %v1052 = vpop.f32.mrf.mxu0
        %v1053 = vadd.f32 %v884, %v1052
        %v1054 = vpop.f32.mrf.mxu0
        %v1055 = vadd.f32 %v886, %v1054
        %1056 = vmatmul.bf16.gmra.mxu0 %v608
        %v1057 = vpop.f32.mrf.mxu0
        %v1058 = vadd.f32 %v889, %v1057
        %v1059 = vpop.f32.mrf.mxu0
        %v1060 = vadd.f32 %v891, %v1059
        %1061 = vmatmul.bf16.gmra.mxu0 %v610
        %v1062 = vpop.f32.mrf.mxu0
        %v1063 = vadd.f32 %v894, %v1062
        %v1064 = vpop.f32.mrf.mxu0
        %v1065 = vadd.f32 %v896, %v1064
        %1066 = vmatmul.bf16.gmra.mxu0 %v612
        %v1067 = vpop.f32.mrf.mxu0
        %v1068 = vadd.f32 %v899, %v1067
        %v1069 = vpop.f32.mrf.mxu0
        %v1070 = vadd.f32 %v901, %v1069
        %1071 = vmatmul.bf16.gmra.mxu0 %v614
        %v1072 = vpop.f32.mrf.mxu0
        %v1073 = vadd.f32 %v904, %v1072
        %v1074 = vpop.f32.mrf.mxu0
        %v1075 = vadd.f32 %v906, %v1074
        %1076 = vmatmul.bf16.gmra.mxu0 %v616
        %v1077 = vpop.f32.mrf.mxu0
        %v1078 = vadd.f32 %v909, %v1077
        %v1079 = vpop.f32.mrf.mxu0
        %v1080 = vadd.f32 %v911, %v1079
        %1081 = vmatmul.bf16.gmra.mxu0 %v618
        %v1082 = vpop.f32.mrf.mxu0
        %v1083 = vadd.f32 %v914, %v1082
        %v1084 = vpop.f32.mrf.mxu0
        %v1085 = vadd.f32 %v916, %v1084
        %1086 = vmatmul.bf16.gmra.mxu0 %v620
        %v1087 = vpop.f32.mrf.mxu0
        %v1088 = vadd.f32 %v919, %v1087
        %v1089 = vpop.f32.mrf.mxu0
        %v1090 = vadd.f32 %v921, %v1089
        %1091 = vmatmul.bf16.gmra.mxu0 %v622
        %v1092 = vpop.f32.mrf.mxu0
        %v1093 = vadd.f32 %v924, %v1092
        %v1094 = vpop.f32.mrf.mxu0
        %v1095 = vadd.f32 %v926, %v1094
        %1096 = vmatmul.bf16.gmra.mxu0 %v624
        %v1097 = vpop.f32.mrf.mxu0
        %v1098 = vadd.f32 %v929, %v1097
        %v1099 = vpop.f32.mrf.mxu0
        %v1100 = vadd.f32 %v931, %v1099
        %1101 = vmatmul.bf16.gmra.mxu0 %v626
        %v1102 = vpop.f32.mrf.mxu0
        %v1103 = vadd.f32 %v934, %v1102
        %v1104 = vpop.f32.mrf.mxu0
        %v1105 = vadd.f32 %v936, %v1104
        %1106 = vmatmul.bf16.gmra.mxu0 %v628
        %v1107 = vpop.f32.mrf.mxu0
        %v1108 = vadd.f32 %v939, %v1107
        %v1109 = vpop.f32.mrf.mxu0
        %v1110 = vadd.f32 %v941, %v1109
        %1111 = vmatmul.bf16.gmra.mxu0 %v630
        %v1112 = vpop.f32.mrf.mxu0
        %v1113 = vadd.f32 %v944, %v1112
        %v1114 = vpop.f32.mrf.mxu0
        %v1115 = vadd.f32 %v946, %v1114
        %1116 = vmatmul.bf16.gmra.mxu0 %v632
        %v1117 = vpop.f32.mrf.mxu0
        %v1118 = vadd.f32 %v949, %v1117
        %v1119 = vpop.f32.mrf.mxu0
        %v1120 = vadd.f32 %v951, %v1119
        %1121 = vmatmul.bf16.gmra.mxu0 %v634
        %v1122 = vpop.f32.mrf.mxu0
        %v1123 = vadd.f32 %v954, %v1122
        %v1124 = vpop.f32.mrf.mxu0
        %v1125 = vadd.f32 %v956, %v1124
        %1126 = vmatmul.bf16.gmra.mxu0 %v636
        %v1127 = vpop.f32.mrf.mxu0
        %v1128 = vadd.f32 %v959, %v1127
        %v1129 = vpop.f32.mrf.mxu0
        %v1130 = vadd.f32 %v961, %v1129
        %1131 = vmatmul.bf16.gmra.mxu0 %v638
        %v1132 = vpop.f32.mrf.mxu0
        %v1133 = vadd.f32 %v964, %v1132
        %v1134 = vpop.f32.mrf.mxu0
        %v1135 = vadd.f32 %v966, %v1134
        %1136 = vdwg.mxu0
        %v1137 = vld [vmem:[%s282] sm:$0x1]
        %v1139 = vperm.slane %v1137, 0
        %v1141 = vmul.f32 %v978, %v1139
        %v1142 = vmul.f32 %v980, %v1139
        %v1143 = vmul.f32 %v983, %v1139
        %v1144 = vmul.f32 %v985, %v1139
        %v1145 = vmul.f32 %v988, %v1139
        %v1146 = vmul.f32 %v990, %v1139
        %v1147 = vmul.f32 %v993, %v1139
        %v1148 = vmul.f32 %v995, %v1139
        %v1149 = vmul.f32 %v998, %v1139
        %v1150 = vmul.f32 %v1000, %v1139
        %v1151 = vmul.f32 %v1003, %v1139
        %v1152 = vmul.f32 %v1005, %v1139
        %v1153 = vmul.f32 %v1008, %v1139
        %v1154 = vmul.f32 %v1010, %v1139
        %v1155 = vmul.f32 %v1013, %v1139
        %v1156 = vmul.f32 %v1015, %v1139
        %v1157 = vmul.f32 %v1018, %v1139
        %v1158 = vmul.f32 %v1020, %v1139
        %v1159 = vmul.f32 %v1023, %v1139
        %v1160 = vmul.f32 %v1025, %v1139
        %v1161 = vmul.f32 %v1028, %v1139
        %v1162 = vmul.f32 %v1030, %v1139
        %v1163 = vmul.f32 %v1033, %v1139
        %v1164 = vmul.f32 %v1035, %v1139
        %v1165 = vmul.f32 %v1038, %v1139
        %v1166 = vmul.f32 %v1040, %v1139
        %v1167 = vmul.f32 %v1043, %v1139
        %v1168 = vmul.f32 %v1045, %v1139
        %v1169 = vmul.f32 %v1048, %v1139
        %v1170 = vmul.f32 %v1050, %v1139
        %v1171 = vmul.f32 %v1053, %v1139
        %v1172 = vmul.f32 %v1055, %v1139
        %v1173 = vmul.f32 %v1058, %v1139
        %v1174 = vmul.f32 %v1060, %v1139
        %v1175 = vmul.f32 %v1063, %v1139
        %v1176 = vmul.f32 %v1065, %v1139
        %v1177 = vmul.f32 %v1068, %v1139
        %v1178 = vmul.f32 %v1070, %v1139
        %v1179 = vmul.f32 %v1073, %v1139
        %v1180 = vmul.f32 %v1075, %v1139
        %v1181 = vmul.f32 %v1078, %v1139
        %v1182 = vmul.f32 %v1080, %v1139
        %v1183 = vmul.f32 %v1083, %v1139
        %v1184 = vmul.f32 %v1085, %v1139
        %v1185 = vmul.f32 %v1088, %v1139
        %v1186 = vmul.f32 %v1090, %v1139
        %v1187 = vmul.f32 %v1093, %v1139
        %v1188 = vmul.f32 %v1095, %v1139
        %v1189 = vmul.f32 %v1098, %v1139
        %v1190 = vmul.f32 %v1100, %v1139
        %v1191 = vmul.f32 %v1103, %v1139
        %v1192 = vmul.f32 %v1105, %v1139
        %v1193 = vmul.f32 %v1108, %v1139
        %v1194 = vmul.f32 %v1110, %v1139
        %v1195 = vmul.f32 %v1113, %v1139
        %v1196 = vmul.f32 %v1115, %v1139
        %v1197 = vmul.f32 %v1118, %v1139
        %v1198 = vmul.f32 %v1120, %v1139
        %v1199 = vmul.f32 %v1123, %v1139
        %v1200 = vmul.f32 %v1125, %v1139
        %v1201 = vmul.f32 %v1128, %v1139
        %v1202 = vmul.f32 %v1130, %v1139
        %v1203 = vmul.f32 %v1133, %v1139
        %v1204 = vmul.f32 %v1135, %v1139
        %v1205 = vld [vmem:[%s285] sm:$0x1]
        %v1207 = vperm.slane %v1205, 0
        %v1209 = vadd.f32 %v1141, %v1207
        %v1210 = vadd.f32 %v1142, %v1207
        %v1211 = vadd.f32 %v1143, %v1207
        %v1212 = vadd.f32 %v1144, %v1207
        %v1213 = vadd.f32 %v1145, %v1207
        %v1214 = vadd.f32 %v1146, %v1207
        %v1215 = vadd.f32 %v1147, %v1207
        %v1216 = vadd.f32 %v1148, %v1207
        %v1217 = vadd.f32 %v1149, %v1207
        %v1218 = vadd.f32 %v1150, %v1207
        %v1219 = vadd.f32 %v1151, %v1207
        %v1220 = vadd.f32 %v1152, %v1207
        %v1221 = vadd.f32 %v1153, %v1207
        %v1222 = vadd.f32 %v1154, %v1207
        %v1223 = vadd.f32 %v1155, %v1207
        %v1224 = vadd.f32 %v1156, %v1207
        %v1225 = vadd.f32 %v1157, %v1207
        %v1226 = vadd.f32 %v1158, %v1207
        %v1227 = vadd.f32 %v1159, %v1207
        %v1228 = vadd.f32 %v1160, %v1207
        %v1229 = vadd.f32 %v1161, %v1207
        %v1230 = vadd.f32 %v1162, %v1207
        %v1231 = vadd.f32 %v1163, %v1207
        %v1232 = vadd.f32 %v1164, %v1207
        %v1233 = vadd.f32 %v1165, %v1207
        %v1234 = vadd.f32 %v1166, %v1207
        %v1235 = vadd.f32 %v1167, %v1207
        %v1236 = vadd.f32 %v1168, %v1207
        %v1237 = vadd.f32 %v1169, %v1207
        %v1238 = vadd.f32 %v1170, %v1207
        %v1239 = vadd.f32 %v1171, %v1207
        %v1240 = vadd.f32 %v1172, %v1207
        %v1241 = vadd.f32 %v1173, %v1207
        %v1242 = vadd.f32 %v1174, %v1207
        %v1243 = vadd.f32 %v1175, %v1207
        %v1244 = vadd.f32 %v1176, %v1207
        %v1245 = vadd.f32 %v1177, %v1207
        %v1246 = vadd.f32 %v1178, %v1207
        %v1247 = vadd.f32 %v1179, %v1207
        %v1248 = vadd.f32 %v1180, %v1207
        %v1249 = vadd.f32 %v1181, %v1207
        %v1250 = vadd.f32 %v1182, %v1207
        %v1251 = vadd.f32 %v1183, %v1207
        %v1252 = vadd.f32 %v1184, %v1207
        %v1253 = vadd.f32 %v1185, %v1207
        %v1254 = vadd.f32 %v1186, %v1207
        %v1255 = vadd.f32 %v1187, %v1207
        %v1256 = vadd.f32 %v1188, %v1207
        %v1257 = vadd.f32 %v1189, %v1207
        %v1258 = vadd.f32 %v1190, %v1207
        %v1259 = vadd.f32 %v1191, %v1207
        %v1260 = vadd.f32 %v1192, %v1207
        %v1261 = vadd.f32 %v1193, %v1207
        %v1262 = vadd.f32 %v1194, %v1207
        %v1263 = vadd.f32 %v1195, %v1207
        %v1264 = vadd.f32 %v1196, %v1207
        %v1265 = vadd.f32 %v1197, %v1207
        %v1266 = vadd.f32 %v1198, %v1207
        %v1267 = vadd.f32 %v1199, %v1207
        %v1268 = vadd.f32 %v1200, %v1207
        %v1269 = vadd.f32 %v1201, %v1207
        %v1270 = vadd.f32 %v1202, %v1207
        %v1271 = vadd.f32 %v1203, %v1207
        %v1272 = vadd.f32 %v1204, %v1207
        %v1273 = vmax.f32 %v1209, 0.0
        %v1274 = vmax.f32 %v1210, 0.0
        %v1275 = vmax.f32 %v1211, 0.0
        %v1276 = vmax.f32 %v1212, 0.0
        %v1277 = vmax.f32 %v1213, 0.0
        %v1278 = vmax.f32 %v1214, 0.0
        %v1279 = vmax.f32 %v1215, 0.0
        %v1280 = vmax.f32 %v1216, 0.0
        %v1281 = vmax.f32 %v1217, 0.0
        %v1282 = vmax.f32 %v1218, 0.0
        %v1283 = vmax.f32 %v1219, 0.0
        %v1284 = vmax.f32 %v1220, 0.0
        %v1285 = vmax.f32 %v1221, 0.0
        %v1286 = vmax.f32 %v1222, 0.0
        %v1287 = vmax.f32 %v1223, 0.0
        %v1288 = vmax.f32 %v1224, 0.0
        %v1289 = vmax.f32 %v1225, 0.0
        %v1290 = vmax.f32 %v1226, 0.0
        %v1291 = vmax.f32 %v1227, 0.0
        %v1292 = vmax.f32 %v1228, 0.0
        %v1293 = vmax.f32 %v1229, 0.0
        %v1294 = vmax.f32 %v1230, 0.0
        %v1295 = vmax.f32 %v1231, 0.0
        %v1296 = vmax.f32 %v1232, 0.0
        %v1297 = vmax.f32 %v1233, 0.0
        %v1298 = vmax.f32 %v1234, 0.0
        %v1299 = vmax.f32 %v1235, 0.0
        %v1300 = vmax.f32 %v1236, 0.0
        %v1301 = vmax.f32 %v1237, 0.0
        %v1302 = vmax.f32 %v1238, 0.0
        %v1303 = vmax.f32 %v1239, 0.0
        %v1304 = vmax.f32 %v1240, 0.0
        %v1305 = vmax.f32 %v1241, 0.0
        %v1306 = vmax.f32 %v1242, 0.0
        %v1307 = vmax.f32 %v1243, 0.0
        %v1308 = vmax.f32 %v1244, 0.0
        %v1309 = vmax.f32 %v1245, 0.0
        %v1310 = vmax.f32 %v1246, 0.0
        %v1311 = vmax.f32 %v1247, 0.0
        %v1312 = vmax.f32 %v1248, 0.0
        %v1313 = vmax.f32 %v1249, 0.0
        %v1314 = vmax.f32 %v1250, 0.0
        %v1315 = vmax.f32 %v1251, 0.0
        %v1316 = vmax.f32 %v1252, 0.0
        %v1317 = vmax.f32 %v1253, 0.0
        %v1318 = vmax.f32 %v1254, 0.0
        %v1319 = vmax.f32 %v1255, 0.0
        %v1320 = vmax.f32 %v1256, 0.0
        %v1321 = vmax.f32 %v1257, 0.0
        %v1322 = vmax.f32 %v1258, 0.0
        %v1323 = vmax.f32 %v1259, 0.0
        %v1324 = vmax.f32 %v1260, 0.0
        %v1325 = vmax.f32 %v1261, 0.0
        %v1326 = vmax.f32 %v1262, 0.0
        %v1327 = vmax.f32 %v1263, 0.0
        %v1328 = vmax.f32 %v1264, 0.0
        %v1329 = vmax.f32 %v1265, 0.0
        %v1330 = vmax.f32 %v1266, 0.0
        %v1331 = vmax.f32 %v1267, 0.0
        %v1332 = vmax.f32 %v1268, 0.0
        %v1333 = vmax.f32 %v1269, 0.0
        %v1334 = vmax.f32 %v1270, 0.0
        %v1335 = vmax.f32 %v1271, 0.0
        %v1336 = vmax.f32 %v1272, 0.0
        %v1337 = vpack.c.bf16 %v1273, %v1273
        %v1338 = vpack.c.bf16 %v1274, %v1274
        %v1339 = vpack.c.bf16 %v1275, %v1275
        %v1340 = vpack.c.bf16 %v1276, %v1276
        %v1341 = vpack.c.bf16 %v1277, %v1277
        %v1342 = vpack.c.bf16 %v1278, %v1278
        %v1343 = vpack.c.bf16 %v1279, %v1279
        %v1344 = vpack.c.bf16 %v1280, %v1280
        %v1345 = vpack.c.bf16 %v1281, %v1281
        %v1346 = vpack.c.bf16 %v1282, %v1282
        %v1347 = vpack.c.bf16 %v1283, %v1283
        %v1348 = vpack.c.bf16 %v1284, %v1284
        %v1349 = vpack.c.bf16 %v1285, %v1285
        %v1350 = vpack.c.bf16 %v1286, %v1286
        %v1351 = vpack.c.bf16 %v1287, %v1287
        %v1352 = vpack.c.bf16 %v1288, %v1288
        %v1353 = vpack.c.bf16 %v1289, %v1289
        %v1354 = vpack.c.bf16 %v1290, %v1290
        %v1355 = vpack.c.bf16 %v1291, %v1291
        %v1356 = vpack.c.bf16 %v1292, %v1292
        %v1357 = vpack.c.bf16 %v1293, %v1293
        %v1358 = vpack.c.bf16 %v1294, %v1294
        %v1359 = vpack.c.bf16 %v1295, %v1295
        %v1360 = vpack.c.bf16 %v1296, %v1296
        %v1361 = vpack.c.bf16 %v1297, %v1297
        %v1362 = vpack.c.bf16 %v1298, %v1298
        %v1363 = vpack.c.bf16 %v1299, %v1299
        %v1364 = vpack.c.bf16 %v1300, %v1300
        %v1365 = vpack.c.bf16 %v1301, %v1301
        %v1366 = vpack.c.bf16 %v1302, %v1302
        %v1367 = vpack.c.bf16 %v1303, %v1303
        %v1368 = vpack.c.bf16 %v1304, %v1304
        %v1369 = vpack.c.bf16 %v1305, %v1305
        %v1370 = vpack.c.bf16 %v1306, %v1306
        %v1371 = vpack.c.bf16 %v1307, %v1307
        %v1372 = vpack.c.bf16 %v1308, %v1308
        %v1373 = vpack.c.bf16 %v1309, %v1309
        %v1374 = vpack.c.bf16 %v1310, %v1310
        %v1375 = vpack.c.bf16 %v1311, %v1311
        %v1376 = vpack.c.bf16 %v1312, %v1312
        %v1377 = vpack.c.bf16 %v1313, %v1313
        %v1378 = vpack.c.bf16 %v1314, %v1314
        %v1379 = vpack.c.bf16 %v1315, %v1315
        %v1380 = vpack.c.bf16 %v1316, %v1316
        %v1381 = vpack.c.bf16 %v1317, %v1317
        %v1382 = vpack.c.bf16 %v1318, %v1318
        %v1383 = vpack.c.bf16 %v1319, %v1319
        %v1384 = vpack.c.bf16 %v1320, %v1320
        %v1385 = vpack.c.bf16 %v1321, %v1321
        %v1386 = vpack.c.bf16 %v1322, %v1322
        %v1387 = vpack.c.bf16 %v1323, %v1323
        %v1388 = vpack.c.bf16 %v1324, %v1324
        %v1389 = vpack.c.bf16 %v1325, %v1325
        %v1390 = vpack.c.bf16 %v1326, %v1326
        %v1391 = vpack.c.bf16 %v1327, %v1327
        %v1392 = vpack.c.bf16 %v1328, %v1328
        %v1393 = vpack.c.bf16 %v1329, %v1329
        %v1394 = vpack.c.bf16 %v1330, %v1330
        %v1395 = vpack.c.bf16 %v1331, %v1331
        %v1396 = vpack.c.bf16 %v1332, %v1332
        %v1397 = vpack.c.bf16 %v1333, %v1333
        %v1398 = vpack.c.bf16 %v1334, %v1334
        %v1399 = vpack.c.bf16 %v1335, %v1335
        %v1400 = vpack.c.bf16 %v1336, %v1336
        %1401 = vst [vmem:[%s278] sm:$0xf] %v1337
        %1402 = vst [vmem:[%s278 + $0x4] sm:$0xf] %v1338
        %1403 = vst [vmem:[%s278 + $0x8] sm:$0xf] %v1339
        %1404 = vst [vmem:[%s278 + $0xc] sm:$0xf] %v1340
        %1405 = vst [vmem:[%s278 + $0x10] sm:$0xf] %v1341
        %1406 = vst [vmem:[%s278 + $0x14] sm:$0xf] %v1342
        %1407 = vst [vmem:[%s278 + $0x18] sm:$0xf] %v1343
        %1408 = vst [vmem:[%s278 + $0x1c] sm:$0xf] %v1344
        %1409 = vst [vmem:[%s278 + $0x20] sm:$0xf] %v1345
        %1410 = vst [vmem:[%s278 + $0x24] sm:$0xf] %v1346
        %1411 = vst [vmem:[%s278 + $0x28] sm:$0xf] %v1347
        %1412 = vst [vmem:[%s278 + $0x2c] sm:$0xf] %v1348
        %1413 = vst [vmem:[%s278 + $0x30] sm:$0xf] %v1349
        %1414 = vst [vmem:[%s278 + $0x34] sm:$0xf] %v1350
        %1415 = vst [vmem:[%s278 + $0x38] sm:$0xf] %v1351
        %1416 = vst [vmem:[%s278 + $0x3c] sm:$0xf] %v1352
        %1417 = vst [vmem:[%s278 + $0x40] sm:$0xf] %v1353
        %1418 = vst [vmem:[%s278 + $0x44] sm:$0xf] %v1354
        %1419 = vst [vmem:[%s278 + $0x48] sm:$0xf] %v1355
        %1420 = vst [vmem:[%s278 + $0x4c] sm:$0xf] %v1356
        %1421 = vst [vmem:[%s278 + $0x50] sm:$0xf] %v1357
        %1422 = vst [vmem:[%s278 + $0x54] sm:$0xf] %v1358
        %1423 = vst [vmem:[%s278 + $0x58] sm:$0xf] %v1359
        %1424 = vst [vmem:[%s278 + $0x5c] sm:$0xf] %v1360
        %1425 = vst [vmem:[%s278 + $0x60] sm:$0xf] %v1361
        %1426 = vst [vmem:[%s278 + $0x64] sm:$0xf] %v1362
        %1427 = vst [vmem:[%s278 + $0x68] sm:$0xf] %v1363
        %1428 = vst [vmem:[%s278 + $0x6c] sm:$0xf] %v1364
        %1429 = vst [vmem:[%s278 + $0x70] sm:$0xf] %v1365
        %1430 = vst [vmem:[%s278 + $0x74] sm:$0xf] %v1366
        %1431 = vst [vmem:[%s278 + $0x78] sm:$0xf] %v1367
        %1432 = vst [vmem:[%s278 + $0x7c] sm:$0xf] %v1368
        %1433 = vst [vmem:[%s278 + $0x80] sm:$0xf] %v1369
        %1434 = vst [vmem:[%s278 + $0x84] sm:$0xf] %v1370
        %1435 = vst [vmem:[%s278 + $0x88] sm:$0xf] %v1371
        %1436 = vst [vmem:[%s278 + $0x8c] sm:$0xf] %v1372
        %1437 = vst [vmem:[%s278 + $0x90] sm:$0xf] %v1373
        %1438 = vst [vmem:[%s278 + $0x94] sm:$0xf] %v1374
        %1439 = vst [vmem:[%s278 + $0x98] sm:$0xf] %v1375
        %1440 = vst [vmem:[%s278 + $0x9c] sm:$0xf] %v1376
        %1441 = vst [vmem:[%s278 + $0xa0] sm:$0xf] %v1377
        %1442 = vst [vmem:[%s278 + $0xa4] sm:$0xf] %v1378
        %1443 = vst [vmem:[%s278 + $0xa8] sm:$0xf] %v1379
        %1444 = vst [vmem:[%s278 + $0xac] sm:$0xf] %v1380
        %1445 = vst [vmem:[%s278 + $0xb0] sm:$0xf] %v1381
        %1446 = vst [vmem:[%s278 + $0xb4] sm:$0xf] %v1382
        %1447 = vst [vmem:[%s278 + $0xb8] sm:$0xf] %v1383
        %1448 = vst [vmem:[%s278 + $0xbc] sm:$0xf] %v1384
        %1449 = vst [vmem:[%s278 + $0xc0] sm:$0xf] %v1385
        %1450 = vst [vmem:[%s278 + $0xc4] sm:$0xf] %v1386
        %1451 = vst [vmem:[%s278 + $0xc8] sm:$0xf] %v1387
        %1452 = vst [vmem:[%s278 + $0xcc] sm:$0xf] %v1388
        %1453 = vst [vmem:[%s278 + $0xd0] sm:$0xf] %v1389
        %1454 = vst [vmem:[%s278 + $0xd4] sm:$0xf] %v1390
        %1455 = vst [vmem:[%s278 + $0xd8] sm:$0xf] %v1391
        %1456 = vst [vmem:[%s278 + $0xdc] sm:$0xf] %v1392
        %1457 = vst [vmem:[%s278 + $0xe0] sm:$0xf] %v1393
        %1458 = vst [vmem:[%s278 + $0xe4] sm:$0xf] %v1394
        %1459 = vst [vmem:[%s278 + $0xe8] sm:$0xf] %v1395
        %1460 = vst [vmem:[%s278 + $0xec] sm:$0xf] %v1396
        %1461 = vst [vmem:[%s278 + $0xf0] sm:$0xf] %v1397
        %1462 = vst [vmem:[%s278 + $0xf4] sm:$0xf] %v1398
        %1463 = vst [vmem:[%s278 + $0xf8] sm:$0xf] %v1399
        %1464 = vst [vmem:[%s278 + $0xfc] sm:$0xf] %v1400
        %s1465 = sand.u32 %s148, 1
        %s1466 = scalar_lea.sflag [#allocation4], %s1465
        %s1467 = sand.u32 %s148, 1
        %s1468 = smul.addr %s1467, 256
        %s1469 = scalar_lea.vmem [#allocation7], %s1468
        // Predicated region
        $region45: #{tpu_custom_call.1} parent=35 // pred_check
          %p1470 = pneg %p158
        $region46: #{tpu_custom_call.1} parent=35 // pred_check_branch
          %1472 = sbr.rel (%p1470) target = $region48
        $region47: #{tpu_custom_call.1} parent=35 // pred_region
          %s1473 = smul.u32 64, %s26
          %1475 = vsyncadd %s1466, 0
          %s1476 = sadd.s32 %s27, %s1473
          %s1477 = smul.addr %s1476, 4
          %s1478 = scalar_lea.hbm %s4, %s1477
          %s1479 = sshll.u32 %s1469, 4
          %s1480 = int_to_ptr.vmem [resolvable:$true] %s1479
          %s1481 = sshll.u32 %s1478, 4
          %s1482 = int_to_ptr.hbm [resolvable:$true] %s1481
          %1487 = dma.vmem_to_hbm [thread:$0]  %s1480, 4096, %s1482, %s1466, 64, 64, 4
        $region48: #{tpu_custom_call.1} parent=35 // pred_fallthru
          _
      $region36: #{tpu_custom_call.1} parent=5 // pred_fallthru
        _
      %p1488 = scmp.le.s32.totalorder 2, %s17
      // Predicated region
      $region49: #{tpu_custom_call.1} parent=5 // pred_check
        %p1489 = pneg %p1488
      $region50: #{tpu_custom_call.1} parent=5 // pred_check_branch
        %1491 = sbr.rel (%p1489) target = $region52
      $region51: #{tpu_custom_call.1} parent=5 // pred_region
        %s1492 = ssub.s32 %s17, 2
        // Predicated region
        $region53: #{tpu_custom_call.1} parent=51 // pred_check
          %p1493 = pneg %p164
        $region54: #{tpu_custom_call.1} parent=51 // pred_check_branch
          %1495 = sbr.rel (%p1493) target = $region56
        $region55: #{tpu_custom_call.1} parent=51 // pred_region
          %s1496 = sand.u32 %s149, 1
          %s1497 = scalar_lea.sflag [#allocation4], %s1496
          %s1498 = sand.u32 %s149, 1
          %s1499 = smul.addr %s1498, 256
          %s1500 = scalar_lea.vmem [#allocation7], %s1499
          %1502 = dma.done %s1497, 4096
        $region56: #{tpu_custom_call.1} parent=51 // pred_fallthru
          _
      $region52: #{tpu_custom_call.1} parent=5 // pred_fallthru
        _
    $region6: #{tpu_custom_call.1} parent=1 // loop_footer
      %s21 = sadd.s32 1, %s17
    $region7: #{tpu_custom_call.1} parent=1 // loop_footer_branch
      %16 = sbr.rel target = $region3
    $region8: #{tpu_custom_call.1} parent=1 // loop_exit
      _
    %1503 = vsyncpa [#allocation3], 1
    %s1504 = scalar_lea.sflag [#allocation3], 1
    %1505 = vsyncpa %s1504, 1
    %1506 = vsyncpa [#allocation6], 1
    %1507 = vsyncpa [#allocation4], 1
    %s1508 = scalar_lea.sflag [#allocation4], 1
    %1509 = vsyncpa %s1508, 1

</llo_original>
